<compile_context>
chip_gen: v6e
topology: v6e:2x2x1
jax: 0.10.0
libtpu: 0.0.40
codegen_flags: <defaults>
</compile_context>

<pallas_src>
import functools
import math

import jax
import jax.numpy as jnp
import numpy as np
from jax import lax
from jax.experimental import pallas as pl
from jax.experimental.pallas import tpu as pltpu  # noqa: F401  (kept for TPU-specific params if needed)


# ---------------- config (BertConfig-like, small synthetic sizes) ----------------
HIDDEN = 32          # config.hidden_size
NUM_HEADS = 4        # config.num_attention_heads
HEAD_DIM = HIDDEN // NUM_HEADS
INTERMEDIATE = 64    # config.intermediate_size
NUM_LAYERS = 2       # num_hidden_layers
LN_EPS = 1e-12       # BERT layer_norm_eps
SEQ = 8              # sequence length
ROOT_IDXS = [0, 3, 5]
VEC_WIDTH = 3 * HIDDEN   # widest packed per-layer vector (fused QKV bias)


def _layer_norm(x, gamma, beta):
    mean = jnp.mean(x, axis=-1, keepdims=True)
    var = jnp.mean((x - mean) ** 2, axis=-1, keepdims=True)
    return (x - mean) * lax.rsqrt(var + LN_EPS) * gamma + beta


def _erf_poly(x):
    # Abramowitz & Stegun 7.1.26 (|err| < 1.5e-7); only exp/mul/add/where -> safe Mosaic lowering.
    a1, a2, a3, a4, a5 = 0.254829592, -0.284496736, 1.421413741, -1.453152027, 1.061405429
    p = 0.3275911
    sgn = jnp.where(x >= 0.0, 1.0, -1.0)
    ax = jnp.abs(x)
    t = 1.0 / (1.0 + p * ax)
    poly = ((((a5 * t + a4) * t + a3) * t + a2) * t + a1) * t
    return sgn * (1.0 - poly * jnp.exp(-ax * ax))


def _gelu(x, erf_fn):
    # exact (erf-based) GELU, as in HF BERT
    return 0.5 * x * (1.0 + erf_fn(x * (1.0 / math.sqrt(2.0))))


# ---------------- fused Pallas kernel: all BertLayers + graph residual ----------------
def graph_encoder_kernel(h_ref, p_ref, bias_ref, wqkv_ref, wo_ref, wi_ref, w2_ref, vec_ref,
                         out_ref, *, num_layers, num_heads, head_dim, hidden, intermediate):
    S = h_ref.shape[0]
    nh, hd = num_heads, head_dim
    scale = 1.0 / math.sqrt(hd)

    h = h_ref[...].astype(jnp.float32)              # [S, H] hidden state (VMEM/vreg resident)
    P = p_ref[...].astype(jnp.float32)              # [S, S] graph selection matrix
    score_bias = bias_ref[...]                      # [nh*S, nh*S] block-diagonal additive mask

    def split_heads(x):                             # [S, H] -> [nh*S, hd] (head-major on sublanes)
        return jnp.concatenate([x[:, i * hd:(i + 1) * hd] for i in range(nh)], axis=0)

    for l in range(num_layers):                     # statically unrolled layer loop
        wqkv = wqkv_ref[l]                          # [H, 3H]
        wo = wo_ref[l]                              # [H, H]
        wi = wi_ref[l]                              # [H, I]
        w2 = w2_ref[l]                              # [I, H]
        vecs = vec_ref[l]                           # [8, 3H] packed vectors
        b_qkv = vecs[0:1, :]
        b_i = vecs[1:2, 0:intermediate]
        b_o = vecs[2:3, 0:hidden]
        g1 = vecs[3:4, 0:hidden]
        be1 = vecs[4:5, 0:hidden]
        b2 = vecs[5:6, 0:hidden]
        g2 = vecs[6:7, 0:hidden]
        be2 = vecs[7:8, 0:hidden]

        # ---- fused QKV projection: one lane-dense MXU push ----
        qkv = jnp.dot(h, wqkv, preferred_element_type=jnp.float32) + b_qkv     # [S, 3H]
        q_b = split_heads(qkv[:, 0:hidden])                                    # [nh*S, hd]
        k_b = split_heads(qkv[:, hidden:2 * hidden])
        v_b = split_heads(qkv[:, 2 * hidden:3 * hidden])

        # ---- all-heads attention in 2 MXU pushes (block-diagonal mask) ----
        s = lax.dot_general(q_b, k_b, (((1,), (1,)), ((), ())),
                            preferred_element_type=jnp.float32) * scale + score_bias
        s = s - jnp.max(s, axis=-1, keepdims=True)
        e = jnp.exp(s)
        probs = e / jnp.sum(e, axis=-1, keepdims=True)                          # exact softmax
        ctx_b = jnp.dot(probs, v_b, preferred_element_type=jnp.float32)         # [nh*S, hd]
        ctx = jnp.concatenate([ctx_b[i * S:(i + 1) * S, :] for i in range(nh)],
                              axis=1)                                            # [S, H]

        # ---- attention output projection + BertSelfOutput LN (single matmul) ----
        attn_out = jnp.dot(ctx, wo, preferred_element_type=jnp.float32) + b_o
        x = _layer_norm(attn_out + h, g1, be1)

        # ---- feed forward + BertOutput LN ----
        inter = _gelu(jnp.dot(x, wi, preferred_element_type=jnp.float32) + b_i, _erf_poly)
        ffn = jnp.dot(inter, w2, preferred_element_type=jnp.float32) + b2
        new_h = _layer_norm(ffn + x, g2, be2)

        # ---- graph residual on the PRE-layer h: trans_mtx @ h[root_idxs] == P @ h ----
        h = jnp.dot(P, h, preferred_element_type=jnp.float32) + new_h

    out_ref[...] = h.astype(out_ref.dtype)


def run_graph_encoder(h, P, score_bias, packed):
    S, H = h.shape
    w_qkv, w_o, w_i, w_2, vecs = packed
    kernel = functools.partial(
        graph_encoder_kernel,
        num_layers=w_qkv.shape[0], num_heads=NUM_HEADS, head_dim=HEAD_DIM,
        hidden=H, intermediate=INTERMEDIATE)
    # No grid: whole arrays live in VMEM for the single invocation (tiny footprint here).
    return pl.pallas_call(
        kernel,
        out_shape=jax.ShapeDtypeStruct((S, H), jnp.float32),
    )(h, P, score_bias, w_qkv, w_o, w_i, w_2, vecs)


# ---------------- glue ----------------
def build_P(root_idxs, seq_len):
    """P = trans_mtx @ one_hot(root_idxs); P @ h == trans_mtx @ h[root_idxs]."""
    num_roots = len(root_idxs)
    lens = list(root_idxs) + [seq_len]
    P = np.zeros((seq_len, seq_len), dtype=np.float32)
    for jj in range(1, num_roots + 1):
        for t in range(lens[jj - 1], lens[jj]):
            P[t, root_idxs[jj - 1]] = 1.0
    return jnp.asarray(P)


def build_score_bias(num_heads, seq_len):
    """Additive block-diagonal mask so all heads' scores fit in one [nh*S, nh*S] matmul."""
    n = num_heads * seq_len
    bias = np.full((n, n), -1e30, dtype=np.float32)
    for h in range(num_heads):
        bias[h * seq_len:(h + 1) * seq_len, h * seq_len:(h + 1) * seq_len] = 0.0
    return jnp.asarray(bias)


def init_layer_params(key):
    ks = jax.random.split(key, 8)
    std = 0.02

    def dense(k, fan_in, fan_out):
        return (jax.random.normal(k, (fan_in, fan_out), jnp.float32) * std,
                jnp.zeros((1, fan_out), jnp.float32))

    wq, bq = dense(ks[0], HIDDEN, HIDDEN)
    wk, bk = dense(ks[1], HIDDEN, HIDDEN)
    wv, bv = dense(ks[2], HIDDEN, HIDDEN)
    wo, bo = dense(ks[3], HIDDEN, HIDDEN)
    g1, be1 = jnp.ones((1, HIDDEN), jnp.float32), jnp.zeros((1, HIDDEN), jnp.float32)
    wi, bi = dense(ks[4], HIDDEN, INTERMEDIATE)
    w2, b2 = dense(ks[5], INTERMEDIATE, HIDDEN)
    g2, be2 = jnp.ones((1, HIDDEN), jnp.float32), jnp.zeros((1, HIDDEN), jnp.float32)
    return (wq, bq, wk, bk, wv, bv, wo, bo, g1, be1, wi, bi, w2, b2, g2, be2)


def pack_params(all_params):
    """Stack per-layer params into fused lane-dense arrays with a leading [L] axis."""
    w_qkv_l, w_o_l, w_i_l, w_2_l, vec_l = [], [], [], [], []

    def pad_row(v):
        return jnp.pad(v, ((0, 0), (0, VEC_WIDTH - v.shape[1])))

    for (wq, bq, wk, bk, wv, bv, wo, bo, g1, be1, wi, bi, w2, b2, g2, be2) in all_params:
        w_qkv_l.append(jnp.concatenate([wq, wk, wv], axis=1))          # [H, 3H]
        w_o_l.append(wo)                                               # [H, H]
        w_i_l.append(wi)                                               # [H, I]
        w_2_l.append(w2)                                               # [I, H]
        b_qkv = jnp.concatenate([bq, bk, bv], axis=1)                  # [1, 3H]
        vec_l.append(jnp.concatenate(
            [pad_row(b_qkv), pad_row(bi), pad_row(bo), pad_row(g1), pad_row(be1),
             pad_row(b2), pad_row(g2), pad_row(be2)], axis=0))          # [8, 3H]

    # TODO(synk): at real sizes store these weight stacks in bf16 (f32 accumulate) on v6e/v7x.
    return (jnp.stack(w_qkv_l), jnp.stack(w_o_l), jnp.stack(w_i_l),
            jnp.stack(w_2_l), jnp.stack(vec_l))


def graph_encoder_forward(hidden_states, root_idxs, all_params):
    """hidden_states: [1, S, H] -> [1, S, H]"""
    assert hidden_states.ndim == 3 and hidden_states.shape[0] == 1
    S = hidden_states.shape[1]
    P = build_P(root_idxs, S)
    score_bias = build_score_bias(NUM_HEADS, S)
    packed = pack_params(all_params)
    h = run_graph_encoder(hidden_states[0], P, score_bias, packed)
    return h[None, :, :]


# ---------------- pure-JAX reference (same math, no Pallas) ----------------
def ref_forward(hidden_states, root_idxs, all_params):
    S = hidden_states.shape[1]
    P = build_P(root_idxs, S)
    h = hidden_states[0]
    for (wq, bq, wk, bk, wv, bv, wo, bo, g1, be1, wi, bi, w2, b2, g2, be2) in all_params:
        q, k, v = h @ wq + bq, h @ wk + bk, h @ wv + bv
        ctx = []
        for hh in range(NUM_HEADS):
            sl = slice(hh * HEAD_DIM, (hh + 1) * HEAD_DIM)
            s = (q[:, sl] @ k[:, sl].T) / math.sqrt(HEAD_DIM)
            ctx.append(jax.nn.softmax(s, axis=-1) @ v[:, sl])
        ctx = jnp.concatenate(ctx, axis=-1)
        x = _layer_norm(ctx @ wo + bo + h, g1, be1)
        new_h = _layer_norm(_gelu(x @ wi + bi, lax.erf) @ w2 + b2 + x, g2, be2)
        h = P @ h + new_h
    return h[None, :, :]


if __name__ == "__main__":
    key = jax.random.PRNGKey(0)
    k_h, k_p = jax.random.split(key)
    hidden_states = jax.random.normal(k_h, (1, SEQ, HIDDEN), jnp.float32)
    layer_keys = jax.random.split(k_p, NUM_LAYERS)
    all_params = [init_layer_params(lk) for lk in layer_keys]

    out = graph_encoder_forward(hidden_states, ROOT_IDXS, all_params)
    out = jax.block_until_ready(out)

    ref = ref_forward(hidden_states, ROOT_IDXS, all_params)
    assert out.shape == (1, SEQ, HIDDEN)
    # Exact-divide softmax + 1.5e-7 erf polynomial in the kernel; remaining difference is
    # only matmul fusion/rounding order, so a tight tolerance holds.
    assert np.allclose(np.asarray(out), np.asarray(ref), atol=2e-3, rtol=2e-3), "mismatch vs reference"

    print("KERNEL_OK")
</pallas_src>

<mosaic_0001>
module attributes {stable_mosaic.version = 11 : i64} {
  func.func @graph_encoder_kernel(%arg0: memref<8x32xf32, #tpu.memory_space<vmem>>, %arg1: memref<8x8xf32, #tpu.memory_space<vmem>>, %arg2: memref<32x32xf32, #tpu.memory_space<vmem>>, %arg3: memref<2x32x96xf32, #tpu.memory_space<vmem>>, %arg4: memref<2x32x32xf32, #tpu.memory_space<vmem>>, %arg5: memref<2x32x64xf32, #tpu.memory_space<vmem>>, %arg6: memref<2x64x32xf32, #tpu.memory_space<vmem>>, %arg7: memref<2x8x96xf32, #tpu.memory_space<vmem>>, %arg8: memref<8x32xf32, #tpu.memory_space<vmem>>) attributes {dimension_semantics = [], scalar_prefetch = 0 : i64, scratch_operands = 0 : i64, tpu.core_type = #tpu.core_type<tc>} {
    %c0 = arith.constant 0 : index
    %c0_0 = arith.constant 0 : index
    %0 = vector.load %arg0[%c0, %c0_0] : memref<8x32xf32, #tpu.memory_space<vmem>>, vector<8x32xf32>
    %c0_1 = arith.constant 0 : index
    %c0_2 = arith.constant 0 : index
    %1 = vector.load %arg1[%c0_1, %c0_2] : memref<8x8xf32, #tpu.memory_space<vmem>>, vector<8x8xf32>
    %c0_3 = arith.constant 0 : index
    %c0_4 = arith.constant 0 : index
    %2 = vector.load %arg2[%c0_3, %c0_4] : memref<32x32xf32, #tpu.memory_space<vmem>>, vector<32x32xf32>
    %c0_5 = arith.constant 0 : index
    %c0_6 = arith.constant 0 : index
    %c0_7 = arith.constant 0 : index
    %3 = vector.load %arg3[%c0_5, %c0_6, %c0_7] : memref<2x32x96xf32, #tpu.memory_space<vmem>>, vector<1x32x96xf32>
    %4 = vector.shape_cast %3 : vector<1x32x96xf32> to vector<32x96xf32>
    %c0_8 = arith.constant 0 : index
    %c0_9 = arith.constant 0 : index
    %c0_10 = arith.constant 0 : index
    %5 = vector.load %arg4[%c0_8, %c0_9, %c0_10] : memref<2x32x32xf32, #tpu.memory_space<vmem>>, vector<1x32x32xf32>
    %6 = vector.shape_cast %5 : vector<1x32x32xf32> to vector<32x32xf32>
    %c0_11 = arith.constant 0 : index
    %c0_12 = arith.constant 0 : index
    %c0_13 = arith.constant 0 : index
    %7 = vector.load %arg5[%c0_11, %c0_12, %c0_13] : memref<2x32x64xf32, #tpu.memory_space<vmem>>, vector<1x32x64xf32>
    %8 = vector.shape_cast %7 : vector<1x32x64xf32> to vector<32x64xf32>
    %c0_14 = arith.constant 0 : index
    %c0_15 = arith.constant 0 : index
    %c0_16 = arith.constant 0 : index
    %9 = vector.load %arg6[%c0_14, %c0_15, %c0_16] : memref<2x64x32xf32, #tpu.memory_space<vmem>>, vector<1x64x32xf32>
    %10 = vector.shape_cast %9 : vector<1x64x32xf32> to vector<64x32xf32>
    %c0_17 = arith.constant 0 : index
    %c0_18 = arith.constant 0 : index
    %c0_19 = arith.constant 0 : index
    %11 = vector.load %arg7[%c0_17, %c0_18, %c0_19] : memref<2x8x96xf32, #tpu.memory_space<vmem>>, vector<1x8x96xf32>
    %12 = vector.shape_cast %11 : vector<1x8x96xf32> to vector<8x96xf32>
    %13 = vector.extract_strided_slice %12 {offsets = [0, 0], sizes = [1, 96], strides = [1, 1]} : vector<8x96xf32> to vector<1x96xf32>
    %14 = vector.extract_strided_slice %12 {offsets = [1, 0], sizes = [1, 64], strides = [1, 1]} : vector<8x96xf32> to vector<1x64xf32>
    %15 = vector.extract_strided_slice %12 {offsets = [2, 0], sizes = [1, 32], strides = [1, 1]} : vector<8x96xf32> to vector<1x32xf32>
    %16 = vector.extract_strided_slice %12 {offsets = [3, 0], sizes = [1, 32], strides = [1, 1]} : vector<8x96xf32> to vector<1x32xf32>
    %17 = vector.extract_strided_slice %12 {offsets = [4, 0], sizes = [1, 32], strides = [1, 1]} : vector<8x96xf32> to vector<1x32xf32>
    %18 = vector.extract_strided_slice %12 {offsets = [5, 0], sizes = [1, 32], strides = [1, 1]} : vector<8x96xf32> to vector<1x32xf32>
    %19 = vector.extract_strided_slice %12 {offsets = [6, 0], sizes = [1, 32], strides = [1, 1]} : vector<8x96xf32> to vector<1x32xf32>
    %20 = vector.extract_strided_slice %12 {offsets = [7, 0], sizes = [1, 32], strides = [1, 1]} : vector<8x96xf32> to vector<1x32xf32>
    %cst = arith.constant dense<0.000000e+00> : vector<8x96xf32>
    %21 = tpu.matmul %0, %4, %cst {dimension_numbers = #tpu.dot_dimension_numbers<[1], [0], [0], [1], [0, 0, 1, 1], [], []>} : vector<8x32xf32>, vector<32x96xf32>, vector<8x96xf32> -> vector<8x96xf32>
    %22 = vector.broadcast %13 : vector<1x96xf32> to vector<8x96xf32>
    %23 = arith.addf %21, %22 : vector<8x96xf32>
    %24 = vector.extract_strided_slice %23 {offsets = [0, 0], sizes = [8, 32], strides = [1, 1]} : vector<8x96xf32> to vector<8x32xf32>
    %25 = vector.extract_strided_slice %24 {offsets = [0, 0], sizes = [8, 8], strides = [1, 1]} : vector<8x32xf32> to vector<8x8xf32>
    %26 = vector.extract_strided_slice %24 {offsets = [0, 8], sizes = [8, 8], strides = [1, 1]} : vector<8x32xf32> to vector<8x8xf32>
    %27 = vector.extract_strided_slice %24 {offsets = [0, 16], sizes = [8, 8], strides = [1, 1]} : vector<8x32xf32> to vector<8x8xf32>
    %28 = vector.extract_strided_slice %24 {offsets = [0, 24], sizes = [8, 8], strides = [1, 1]} : vector<8x32xf32> to vector<8x8xf32>
    %29 = tpu.concatenate %25, %26, %27, %28 in 0 : vector<8x8xf32>, vector<8x8xf32>, vector<8x8xf32>, vector<8x8xf32> -> vector<32x8xf32>
    %30 = vector.extract_strided_slice %23 {offsets = [0, 32], sizes = [8, 32], strides = [1, 1]} : vector<8x96xf32> to vector<8x32xf32>
    %31 = vector.extract_strided_slice %30 {offsets = [0, 0], sizes = [8, 8], strides = [1, 1]} : vector<8x32xf32> to vector<8x8xf32>
    %32 = vector.extract_strided_slice %30 {offsets = [0, 8], sizes = [8, 8], strides = [1, 1]} : vector<8x32xf32> to vector<8x8xf32>
    %33 = vector.extract_strided_slice %30 {offsets = [0, 16], sizes = [8, 8], strides = [1, 1]} : vector<8x32xf32> to vector<8x8xf32>
    %34 = vector.extract_strided_slice %30 {offsets = [0, 24], sizes = [8, 8], strides = [1, 1]} : vector<8x32xf32> to vector<8x8xf32>
    %35 = tpu.concatenate %31, %32, %33, %34 in 0 : vector<8x8xf32>, vector<8x8xf32>, vector<8x8xf32>, vector<8x8xf32> -> vector<32x8xf32>
    %36 = vector.extract_strided_slice %23 {offsets = [0, 64], sizes = [8, 32], strides = [1, 1]} : vector<8x96xf32> to vector<8x32xf32>
    %37 = vector.extract_strided_slice %36 {offsets = [0, 0], sizes = [8, 8], strides = [1, 1]} : vector<8x32xf32> to vector<8x8xf32>
    %38 = vector.extract_strided_slice %36 {offsets = [0, 8], sizes = [8, 8], strides = [1, 1]} : vector<8x32xf32> to vector<8x8xf32>
    %39 = vector.extract_strided_slice %36 {offsets = [0, 16], sizes = [8, 8], strides = [1, 1]} : vector<8x32xf32> to vector<8x8xf32>
    %40 = vector.extract_strided_slice %36 {offsets = [0, 24], sizes = [8, 8], strides = [1, 1]} : vector<8x32xf32> to vector<8x8xf32>
    %41 = tpu.concatenate %37, %38, %39, %40 in 0 : vector<8x8xf32>, vector<8x8xf32>, vector<8x8xf32>, vector<8x8xf32> -> vector<32x8xf32>
    %cst_20 = arith.constant dense<0.000000e+00> : vector<32x32xf32>
    %42 = tpu.matmul %29, %35, %cst_20 {dimension_numbers = #tpu.dot_dimension_numbers<[1], [1], [0], [0], [0, 0, 1, 0], [], []>} : vector<32x8xf32>, vector<32x8xf32>, vector<32x32xf32> -> vector<32x32xf32>
    %cst_21 = arith.constant 0.353553385 : f32
    %43 = vector.broadcast %cst_21 : f32 to vector<32x32xf32>
    %44 = arith.mulf %42, %43 : vector<32x32xf32>
    %45 = arith.addf %44, %2 : vector<32x32xf32>
    %cst_22 = arith.constant dense<0xFF800000> : vector<32xf32>
    %46 = vector.multi_reduction <maximumf>, %45, %cst_22 [1] : vector<32x32xf32> to vector<32xf32>
    %47 = vector.shape_cast %46 : vector<32xf32> to vector<32x1xf32>
    %48 = vector.broadcast %47 : vector<32x1xf32> to vector<32x32xf32>
    %49 = arith.subf %45, %48 : vector<32x32xf32>
    %50 = math.exp %49 : vector<32x32xf32>
    %cst_23 = arith.constant dense<0.000000e+00> : vector<32xf32>
    %51 = vector.multi_reduction <add>, %50, %cst_23 [1] : vector<32x32xf32> to vector<32xf32>
    %52 = vector.shape_cast %51 : vector<32xf32> to vector<32x1xf32>
    %53 = vector.broadcast %52 : vector<32x1xf32> to vector<32x32xf32>
    %54 = arith.divf %50, %53 : vector<32x32xf32>
    %cst_24 = arith.constant dense<0.000000e+00> : vector<32x8xf32>
    %55 = tpu.matmul %54, %41, %cst_24 {dimension_numbers = #tpu.dot_dimension_numbers<[1], [0], [0], [1], [0, 0, 1, 1], [], []>} : vector<32x32xf32>, vector<32x8xf32>, vector<32x8xf32> -> vector<32x8xf32>
    %56 = vector.extract_strided_slice %55 {offsets = [0, 0], sizes = [8, 8], strides = [1, 1]} : vector<32x8xf32> to vector<8x8xf32>
    %57 = vector.extract_strided_slice %55 {offsets = [8, 0], sizes = [8, 8], strides = [1, 1]} : vector<32x8xf32> to vector<8x8xf32>
    %58 = vector.extract_strided_slice %55 {offsets = [16, 0], sizes = [8, 8], strides = [1, 1]} : vector<32x8xf32> to vector<8x8xf32>
    %59 = vector.extract_strided_slice %55 {offsets = [24, 0], sizes = [8, 8], strides = [1, 1]} : vector<32x8xf32> to vector<8x8xf32>
    %60 = tpu.concatenate %56, %57, %58, %59 in 1 : vector<8x8xf32>, vector<8x8xf32>, vector<8x8xf32>, vector<8x8xf32> -> vector<8x32xf32>
    %cst_25 = arith.constant dense<0.000000e+00> : vector<8x32xf32>
    %61 = tpu.matmul %60, %6, %cst_25 {dimension_numbers = #tpu.dot_dimension_numbers<[1], [0], [0], [1], [0, 0, 1, 1], [], []>} : vector<8x32xf32>, vector<32x32xf32>, vector<8x32xf32> -> vector<8x32xf32>
    %62 = vector.broadcast %15 : vector<1x32xf32> to vector<8x32xf32>
    %63 = arith.addf %61, %62 : vector<8x32xf32>
    %64 = arith.addf %63, %0 : vector<8x32xf32>
    %cst_26 = arith.constant dense<0.000000e+00> : vector<8xf32>
    %65 = vector.multi_reduction <add>, %64, %cst_26 [1] : vector<8x32xf32> to vector<8xf32>
    %66 = vector.shape_cast %65 : vector<8xf32> to vector<8x1xf32>
    %cst_27 = arith.constant 3.200000e+01 : f32
    %67 = vector.broadcast %cst_27 : f32 to vector<8x1xf32>
    %68 = arith.divf %66, %67 : vector<8x1xf32>
    %69 = vector.broadcast %68 : vector<8x1xf32> to vector<8x32xf32>
    %70 = arith.subf %64, %69 : vector<8x32xf32>
    %71 = arith.mulf %70, %70 : vector<8x32xf32>
    %cst_28 = arith.constant dense<0.000000e+00> : vector<8xf32>
    %72 = vector.multi_reduction <add>, %71, %cst_28 [1] : vector<8x32xf32> to vector<8xf32>
    %73 = vector.shape_cast %72 : vector<8xf32> to vector<8x1xf32>
    %cst_29 = arith.constant 3.200000e+01 : f32
    %74 = vector.broadcast %cst_29 : f32 to vector<8x1xf32>
    %75 = arith.divf %73, %74 : vector<8x1xf32>
    %76 = vector.broadcast %68 : vector<8x1xf32> to vector<8x32xf32>
    %77 = arith.subf %64, %76 : vector<8x32xf32>
    %cst_30 = arith.constant 9.99999996E-13 : f32
    %78 = vector.broadcast %cst_30 : f32 to vector<8x1xf32>
    %79 = arith.addf %75, %78 : vector<8x1xf32>
    %80 = math.rsqrt %79 : vector<8x1xf32>
    %81 = vector.broadcast %80 : vector<8x1xf32> to vector<8x32xf32>
    %82 = arith.mulf %77, %81 : vector<8x32xf32>
    %83 = vector.broadcast %16 : vector<1x32xf32> to vector<8x32xf32>
    %84 = arith.mulf %82, %83 : vector<8x32xf32>
    %85 = vector.broadcast %17 : vector<1x32xf32> to vector<8x32xf32>
    %86 = arith.addf %84, %85 : vector<8x32xf32>
    %cst_31 = arith.constant dense<0.000000e+00> : vector<8x64xf32>
    %87 = tpu.matmul %86, %8, %cst_31 {dimension_numbers = #tpu.dot_dimension_numbers<[1], [0], [0], [1], [0, 0, 1, 1], [], []>} : vector<8x32xf32>, vector<32x64xf32>, vector<8x64xf32> -> vector<8x64xf32>
    %88 = vector.broadcast %14 : vector<1x64xf32> to vector<8x64xf32>
    %89 = arith.addf %87, %88 : vector<8x64xf32>
    %cst_32 = arith.constant 5.000000e-01 : f32
    %90 = vector.broadcast %cst_32 : f32 to vector<8x64xf32>
    %91 = arith.mulf %90, %89 : vector<8x64xf32>
    %cst_33 = arith.constant 0.707106769 : f32
    %92 = vector.broadcast %cst_33 : f32 to vector<8x64xf32>
    %93 = arith.mulf %89, %92 : vector<8x64xf32>
    %cst_34 = arith.constant 0.000000e+00 : f32
    %94 = vector.broadcast %cst_34 : f32 to vector<8x64xf32>
    %95 = arith.cmpf oge, %93, %94 : vector<8x64xf32>
    %cst_35 = arith.constant 1.000000e+00 : f32
    %cst_36 = arith.constant -1.000000e+00 : f32
    %96 = vector.broadcast %cst_35 : f32 to vector<8x64xf32>
    %97 = vector.broadcast %cst_36 : f32 to vector<8x64xf32>
    %98 = arith.select %95, %96, %97 : vector<8x64xi1>, vector<8x64xf32>
    %99 = math.absf %93 : vector<8x64xf32>
    %cst_37 = arith.constant 0.327591091 : f32
    %100 = vector.broadcast %cst_37 : f32 to vector<8x64xf32>
    %101 = arith.mulf %100, %99 : vector<8x64xf32>
    %cst_38 = arith.constant 1.000000e+00 : f32
    %102 = vector.broadcast %cst_38 : f32 to vector<8x64xf32>
    %103 = arith.addf %102, %101 : vector<8x64xf32>
    %cst_39 = arith.constant 1.000000e+00 : f32
    %104 = vector.broadcast %cst_39 : f32 to vector<8x64xf32>
    %105 = arith.divf %104, %103 : vector<8x64xf32>
    %cst_40 = arith.constant 1.06140542 : f32
    %106 = vector.broadcast %cst_40 : f32 to vector<8x64xf32>
    %107 = arith.mulf %106, %105 : vector<8x64xf32>
    %cst_41 = arith.constant -1.45315206 : f32
    %108 = vector.broadcast %cst_41 : f32 to vector<8x64xf32>
    %109 = arith.addf %107, %108 : vector<8x64xf32>
    %110 = arith.mulf %109, %105 : vector<8x64xf32>
    %cst_42 = arith.constant 1.42141378 : f32
    %111 = vector.broadcast %cst_42 : f32 to vector<8x64xf32>
    %112 = arith.addf %110, %111 : vector<8x64xf32>
    %113 = arith.mulf %112, %105 : vector<8x64xf32>
    %cst_43 = arith.constant -0.284496725 : f32
    %114 = vector.broadcast %cst_43 : f32 to vector<8x64xf32>
    %115 = arith.addf %113, %114 : vector<8x64xf32>
    %116 = arith.mulf %115, %105 : vector<8x64xf32>
    %cst_44 = arith.constant 0.254829586 : f32
    %117 = vector.broadcast %cst_44 : f32 to vector<8x64xf32>
    %118 = arith.addf %116, %117 : vector<8x64xf32>
    %119 = arith.mulf %118, %105 : vector<8x64xf32>
    %cst_45 = arith.constant 0.000000e+00 : f32
    %120 = vector.broadcast %cst_45 : f32 to vector<8x64xf32>
    %121 = arith.subf %120, %99 : vector<8x64xf32>
    %122 = arith.mulf %121, %99 : vector<8x64xf32>
    %123 = math.exp %122 : vector<8x64xf32>
    %124 = arith.mulf %119, %123 : vector<8x64xf32>
    %cst_46 = arith.constant 1.000000e+00 : f32
    %125 = vector.broadcast %cst_46 : f32 to vector<8x64xf32>
    %126 = arith.subf %125, %124 : vector<8x64xf32>
    %127 = arith.mulf %98, %126 : vector<8x64xf32>
    %cst_47 = arith.constant 1.000000e+00 : f32
    %128 = vector.broadcast %cst_47 : f32 to vector<8x64xf32>
    %129 = arith.addf %128, %127 : vector<8x64xf32>
    %130 = arith.mulf %91, %129 : vector<8x64xf32>
    %cst_48 = arith.constant dense<0.000000e+00> : vector<8x32xf32>
    %131 = tpu.matmul %130, %10, %cst_48 {dimension_numbers = #tpu.dot_dimension_numbers<[1], [0], [0], [1], [0, 0, 1, 1], [], []>} : vector<8x64xf32>, vector<64x32xf32>, vector<8x32xf32> -> vector<8x32xf32>
    %132 = vector.broadcast %18 : vector<1x32xf32> to vector<8x32xf32>
    %133 = arith.addf %131, %132 : vector<8x32xf32>
    %134 = arith.addf %133, %86 : vector<8x32xf32>
    %cst_49 = arith.constant dense<0.000000e+00> : vector<8xf32>
    %135 = vector.multi_reduction <add>, %134, %cst_49 [1] : vector<8x32xf32> to vector<8xf32>
    %136 = vector.shape_cast %135 : vector<8xf32> to vector<8x1xf32>
    %cst_50 = arith.constant 3.200000e+01 : f32
    %137 = vector.broadcast %cst_50 : f32 to vector<8x1xf32>
    %138 = arith.divf %136, %137 : vector<8x1xf32>
    %139 = vector.broadcast %138 : vector<8x1xf32> to vector<8x32xf32>
    %140 = arith.subf %134, %139 : vector<8x32xf32>
    %141 = arith.mulf %140, %140 : vector<8x32xf32>
    %cst_51 = arith.constant dense<0.000000e+00> : vector<8xf32>
    %142 = vector.multi_reduction <add>, %141, %cst_51 [1] : vector<8x32xf32> to vector<8xf32>
    %143 = vector.shape_cast %142 : vector<8xf32> to vector<8x1xf32>
    %cst_52 = arith.constant 3.200000e+01 : f32
    %144 = vector.broadcast %cst_52 : f32 to vector<8x1xf32>
    %145 = arith.divf %143, %144 : vector<8x1xf32>
    %146 = vector.broadcast %138 : vector<8x1xf32> to vector<8x32xf32>
    %147 = arith.subf %134, %146 : vector<8x32xf32>
    %cst_53 = arith.constant 9.99999996E-13 : f32
    %148 = vector.broadcast %cst_53 : f32 to vector<8x1xf32>
    %149 = arith.addf %145, %148 : vector<8x1xf32>
    %150 = math.rsqrt %149 : vector<8x1xf32>
    %151 = vector.broadcast %150 : vector<8x1xf32> to vector<8x32xf32>
    %152 = arith.mulf %147, %151 : vector<8x32xf32>
    %153 = vector.broadcast %19 : vector<1x32xf32> to vector<8x32xf32>
    %154 = arith.mulf %152, %153 : vector<8x32xf32>
    %155 = vector.broadcast %20 : vector<1x32xf32> to vector<8x32xf32>
    %156 = arith.addf %154, %155 : vector<8x32xf32>
    %cst_54 = arith.constant dense<0.000000e+00> : vector<8x32xf32>
    %157 = tpu.matmul %1, %0, %cst_54 {dimension_numbers = #tpu.dot_dimension_numbers<[1], [0], [0], [1], [0, 0, 1, 1], [], []>} : vector<8x8xf32>, vector<8x32xf32>, vector<8x32xf32> -> vector<8x32xf32>
    %158 = arith.addf %157, %156 : vector<8x32xf32>
    %c1 = arith.constant 1 : index
    %c0_55 = arith.constant 0 : index
    %c0_56 = arith.constant 0 : index
    %159 = vector.load %arg3[%c1, %c0_55, %c0_56] : memref<2x32x96xf32, #tpu.memory_space<vmem>>, vector<1x32x96xf32>
    %160 = vector.shape_cast %159 : vector<1x32x96xf32> to vector<32x96xf32>
    %c1_57 = arith.constant 1 : index
    %c0_58 = arith.constant 0 : index
    %c0_59 = arith.constant 0 : index
    %161 = vector.load %arg4[%c1_57, %c0_58, %c0_59] : memref<2x32x32xf32, #tpu.memory_space<vmem>>, vector<1x32x32xf32>
    %162 = vector.shape_cast %161 : vector<1x32x32xf32> to vector<32x32xf32>
    %c1_60 = arith.constant 1 : index
    %c0_61 = arith.constant 0 : index
    %c0_62 = arith.constant 0 : index
    %163 = vector.load %arg5[%c1_60, %c0_61, %c0_62] : memref<2x32x64xf32, #tpu.memory_space<vmem>>, vector<1x32x64xf32>
    %164 = vector.shape_cast %163 : vector<1x32x64xf32> to vector<32x64xf32>
    %c1_63 = arith.constant 1 : index
    %c0_64 = arith.constant 0 : index
    %c0_65 = arith.constant 0 : index
    %165 = vector.load %arg6[%c1_63, %c0_64, %c0_65] : memref<2x64x32xf32, #tpu.memory_space<vmem>>, vector<1x64x32xf32>
    %166 = vector.shape_cast %165 : vector<1x64x32xf32> to vector<64x32xf32>
    %c1_66 = arith.constant 1 : index
    %c0_67 = arith.constant 0 : index
    %c0_68 = arith.constant 0 : index
    %167 = vector.load %arg7[%c1_66, %c0_67, %c0_68] : memref<2x8x96xf32, #tpu.memory_space<vmem>>, vector<1x8x96xf32>
    %168 = vector.shape_cast %167 : vector<1x8x96xf32> to vector<8x96xf32>
    %169 = vector.extract_strided_slice %168 {offsets = [0, 0], sizes = [1, 96], strides = [1, 1]} : vector<8x96xf32> to vector<1x96xf32>
    %170 = vector.extract_strided_slice %168 {offsets = [1, 0], sizes = [1, 64], strides = [1, 1]} : vector<8x96xf32> to vector<1x64xf32>
    %171 = vector.extract_strided_slice %168 {offsets = [2, 0], sizes = [1, 32], strides = [1, 1]} : vector<8x96xf32> to vector<1x32xf32>
    %172 = vector.extract_strided_slice %168 {offsets = [3, 0], sizes = [1, 32], strides = [1, 1]} : vector<8x96xf32> to vector<1x32xf32>
    %173 = vector.extract_strided_slice %168 {offsets = [4, 0], sizes = [1, 32], strides = [1, 1]} : vector<8x96xf32> to vector<1x32xf32>
    %174 = vector.extract_strided_slice %168 {offsets = [5, 0], sizes = [1, 32], strides = [1, 1]} : vector<8x96xf32> to vector<1x32xf32>
    %175 = vector.extract_strided_slice %168 {offsets = [6, 0], sizes = [1, 32], strides = [1, 1]} : vector<8x96xf32> to vector<1x32xf32>
    %176 = vector.extract_strided_slice %168 {offsets = [7, 0], sizes = [1, 32], strides = [1, 1]} : vector<8x96xf32> to vector<1x32xf32>
    %cst_69 = arith.constant dense<0.000000e+00> : vector<8x96xf32>
    %177 = tpu.matmul %158, %160, %cst_69 {dimension_numbers = #tpu.dot_dimension_numbers<[1], [0], [0], [1], [0, 0, 1, 1], [], []>} : vector<8x32xf32>, vector<32x96xf32>, vector<8x96xf32> -> vector<8x96xf32>
    %178 = vector.broadcast %169 : vector<1x96xf32> to vector<8x96xf32>
    %179 = arith.addf %177, %178 : vector<8x96xf32>
    %180 = vector.extract_strided_slice %179 {offsets = [0, 0], sizes = [8, 32], strides = [1, 1]} : vector<8x96xf32> to vector<8x32xf32>
    %181 = vector.extract_strided_slice %180 {offsets = [0, 0], sizes = [8, 8], strides = [1, 1]} : vector<8x32xf32> to vector<8x8xf32>
    %182 = vector.extract_strided_slice %180 {offsets = [0, 8], sizes = [8, 8], strides = [1, 1]} : vector<8x32xf32> to vector<8x8xf32>
    %183 = vector.extract_strided_slice %180 {offsets = [0, 16], sizes = [8, 8], strides = [1, 1]} : vector<8x32xf32> to vector<8x8xf32>
    %184 = vector.extract_strided_slice %180 {offsets = [0, 24], sizes = [8, 8], strides = [1, 1]} : vector<8x32xf32> to vector<8x8xf32>
    %185 = tpu.concatenate %181, %182, %183, %184 in 0 : vector<8x8xf32>, vector<8x8xf32>, vector<8x8xf32>, vector<8x8xf32> -> vector<32x8xf32>
    %186 = vector.extract_strided_slice %179 {offsets = [0, 32], sizes = [8, 32], strides = [1, 1]} : vector<8x96xf32> to vector<8x32xf32>
    %187 = vector.extract_strided_slice %186 {offsets = [0, 0], sizes = [8, 8], strides = [1, 1]} : vector<8x32xf32> to vector<8x8xf32>
    %188 = vector.extract_strided_slice %186 {offsets = [0, 8], sizes = [8, 8], strides = [1, 1]} : vector<8x32xf32> to vector<8x8xf32>
    %189 = vector.extract_strided_slice %186 {offsets = [0, 16], sizes = [8, 8], strides = [1, 1]} : vector<8x32xf32> to vector<8x8xf32>
    %190 = vector.extract_strided_slice %186 {offsets = [0, 24], sizes = [8, 8], strides = [1, 1]} : vector<8x32xf32> to vector<8x8xf32>
    %191 = tpu.concatenate %187, %188, %189, %190 in 0 : vector<8x8xf32>, vector<8x8xf32>, vector<8x8xf32>, vector<8x8xf32> -> vector<32x8xf32>
    %192 = vector.extract_strided_slice %179 {offsets = [0, 64], sizes = [8, 32], strides = [1, 1]} : vector<8x96xf32> to vector<8x32xf32>
    %193 = vector.extract_strided_slice %192 {offsets = [0, 0], sizes = [8, 8], strides = [1, 1]} : vector<8x32xf32> to vector<8x8xf32>
    %194 = vector.extract_strided_slice %192 {offsets = [0, 8], sizes = [8, 8], strides = [1, 1]} : vector<8x32xf32> to vector<8x8xf32>
    %195 = vector.extract_strided_slice %192 {offsets = [0, 16], sizes = [8, 8], strides = [1, 1]} : vector<8x32xf32> to vector<8x8xf32>
    %196 = vector.extract_strided_slice %192 {offsets = [0, 24], sizes = [8, 8], strides = [1, 1]} : vector<8x32xf32> to vector<8x8xf32>
    %197 = tpu.concatenate %193, %194, %195, %196 in 0 : vector<8x8xf32>, vector<8x8xf32>, vector<8x8xf32>, vector<8x8xf32> -> vector<32x8xf32>
    %cst_70 = arith.constant dense<0.000000e+00> : vector<32x32xf32>
    %198 = tpu.matmul %185, %191, %cst_70 {dimension_numbers = #tpu.dot_dimension_numbers<[1], [1], [0], [0], [0, 0, 1, 0], [], []>} : vector<32x8xf32>, vector<32x8xf32>, vector<32x32xf32> -> vector<32x32xf32>
    %cst_71 = arith.constant 0.353553385 : f32
    %199 = vector.broadcast %cst_71 : f32 to vector<32x32xf32>
    %200 = arith.mulf %198, %199 : vector<32x32xf32>
    %201 = arith.addf %200, %2 : vector<32x32xf32>
    %cst_72 = arith.constant dense<0xFF800000> : vector<32xf32>
    %202 = vector.multi_reduction <maximumf>, %201, %cst_72 [1] : vector<32x32xf32> to vector<32xf32>
    %203 = vector.shape_cast %202 : vector<32xf32> to vector<32x1xf32>
    %204 = vector.broadcast %203 : vector<32x1xf32> to vector<32x32xf32>
    %205 = arith.subf %201, %204 : vector<32x32xf32>
    %206 = math.exp %205 : vector<32x32xf32>
    %cst_73 = arith.constant dense<0.000000e+00> : vector<32xf32>
    %207 = vector.multi_reduction <add>, %206, %cst_73 [1] : vector<32x32xf32> to vector<32xf32>
    %208 = vector.shape_cast %207 : vector<32xf32> to vector<32x1xf32>
    %209 = vector.broadcast %208 : vector<32x1xf32> to vector<32x32xf32>
    %210 = arith.divf %206, %209 : vector<32x32xf32>
    %cst_74 = arith.constant dense<0.000000e+00> : vector<32x8xf32>
    %211 = tpu.matmul %210, %197, %cst_74 {dimension_numbers = #tpu.dot_dimension_numbers<[1], [0], [0], [1], [0, 0, 1, 1], [], []>} : vector<32x32xf32>, vector<32x8xf32>, vector<32x8xf32> -> vector<32x8xf32>
    %212 = vector.extract_strided_slice %211 {offsets = [0, 0], sizes = [8, 8], strides = [1, 1]} : vector<32x8xf32> to vector<8x8xf32>
    %213 = vector.extract_strided_slice %211 {offsets = [8, 0], sizes = [8, 8], strides = [1, 1]} : vector<32x8xf32> to vector<8x8xf32>
    %214 = vector.extract_strided_slice %211 {offsets = [16, 0], sizes = [8, 8], strides = [1, 1]} : vector<32x8xf32> to vector<8x8xf32>
    %215 = vector.extract_strided_slice %211 {offsets = [24, 0], sizes = [8, 8], strides = [1, 1]} : vector<32x8xf32> to vector<8x8xf32>
    %216 = tpu.concatenate %212, %213, %214, %215 in 1 : vector<8x8xf32>, vector<8x8xf32>, vector<8x8xf32>, vector<8x8xf32> -> vector<8x32xf32>
    %cst_75 = arith.constant dense<0.000000e+00> : vector<8x32xf32>
    %217 = tpu.matmul %216, %162, %cst_75 {dimension_numbers = #tpu.dot_dimension_numbers<[1], [0], [0], [1], [0, 0, 1, 1], [], []>} : vector<8x32xf32>, vector<32x32xf32>, vector<8x32xf32> -> vector<8x32xf32>
    %218 = vector.broadcast %171 : vector<1x32xf32> to vector<8x32xf32>
    %219 = arith.addf %217, %218 : vector<8x32xf32>
    %220 = arith.addf %219, %158 : vector<8x32xf32>
    %cst_76 = arith.constant dense<0.000000e+00> : vector<8xf32>
    %221 = vector.multi_reduction <add>, %220, %cst_76 [1] : vector<8x32xf32> to vector<8xf32>
    %222 = vector.shape_cast %221 : vector<8xf32> to vector<8x1xf32>
    %cst_77 = arith.constant 3.200000e+01 : f32
    %223 = vector.broadcast %cst_77 : f32 to vector<8x1xf32>
    %224 = arith.divf %222, %223 : vector<8x1xf32>
    %225 = vector.broadcast %224 : vector<8x1xf32> to vector<8x32xf32>
    %226 = arith.subf %220, %225 : vector<8x32xf32>
    %227 = arith.mulf %226, %226 : vector<8x32xf32>
    %cst_78 = arith.constant dense<0.000000e+00> : vector<8xf32>
    %228 = vector.multi_reduction <add>, %227, %cst_78 [1] : vector<8x32xf32> to vector<8xf32>
    %229 = vector.shape_cast %228 : vector<8xf32> to vector<8x1xf32>
    %cst_79 = arith.constant 3.200000e+01 : f32
    %230 = vector.broadcast %cst_79 : f32 to vector<8x1xf32>
    %231 = arith.divf %229, %230 : vector<8x1xf32>
    %232 = vector.broadcast %224 : vector<8x1xf32> to vector<8x32xf32>
    %233 = arith.subf %220, %232 : vector<8x32xf32>
    %cst_80 = arith.constant 9.99999996E-13 : f32
    %234 = vector.broadcast %cst_80 : f32 to vector<8x1xf32>
    %235 = arith.addf %231, %234 : vector<8x1xf32>
    %236 = math.rsqrt %235 : vector<8x1xf32>
    %237 = vector.broadcast %236 : vector<8x1xf32> to vector<8x32xf32>
    %238 = arith.mulf %233, %237 : vector<8x32xf32>
    %239 = vector.broadcast %172 : vector<1x32xf32> to vector<8x32xf32>
    %240 = arith.mulf %238, %239 : vector<8x32xf32>
    %241 = vector.broadcast %173 : vector<1x32xf32> to vector<8x32xf32>
    %242 = arith.addf %240, %241 : vector<8x32xf32>
    %cst_81 = arith.constant dense<0.000000e+00> : vector<8x64xf32>
    %243 = tpu.matmul %242, %164, %cst_81 {dimension_numbers = #tpu.dot_dimension_numbers<[1], [0], [0], [1], [0, 0, 1, 1], [], []>} : vector<8x32xf32>, vector<32x64xf32>, vector<8x64xf32> -> vector<8x64xf32>
    %244 = vector.broadcast %170 : vector<1x64xf32> to vector<8x64xf32>
    %245 = arith.addf %243, %244 : vector<8x64xf32>
    %cst_82 = arith.constant 5.000000e-01 : f32
    %246 = vector.broadcast %cst_82 : f32 to vector<8x64xf32>
    %247 = arith.mulf %246, %245 : vector<8x64xf32>
    %cst_83 = arith.constant 0.707106769 : f32
    %248 = vector.broadcast %cst_83 : f32 to vector<8x64xf32>
    %249 = arith.mulf %245, %248 : vector<8x64xf32>
    %cst_84 = arith.constant 0.000000e+00 : f32
    %250 = vector.broadcast %cst_84 : f32 to vector<8x64xf32>
    %251 = arith.cmpf oge, %249, %250 : vector<8x64xf32>
    %cst_85 = arith.constant 1.000000e+00 : f32
    %cst_86 = arith.constant -1.000000e+00 : f32
    %252 = vector.broadcast %cst_85 : f32 to vector<8x64xf32>
    %253 = vector.broadcast %cst_86 : f32 to vector<8x64xf32>
    %254 = arith.select %251, %252, %253 : vector<8x64xi1>, vector<8x64xf32>
    %255 = math.absf %249 : vector<8x64xf32>
    %cst_87 = arith.constant 0.327591091 : f32
    %256 = vector.broadcast %cst_87 : f32 to vector<8x64xf32>
    %257 = arith.mulf %256, %255 : vector<8x64xf32>
    %cst_88 = arith.constant 1.000000e+00 : f32
    %258 = vector.broadcast %cst_88 : f32 to vector<8x64xf32>
    %259 = arith.addf %258, %257 : vector<8x64xf32>
    %cst_89 = arith.constant 1.000000e+00 : f32
    %260 = vector.broadcast %cst_89 : f32 to vector<8x64xf32>
    %261 = arith.divf %260, %259 : vector<8x64xf32>
    %cst_90 = arith.constant 1.06140542 : f32
    %262 = vector.broadcast %cst_90 : f32 to vector<8x64xf32>
    %263 = arith.mulf %262, %261 : vector<8x64xf32>
    %cst_91 = arith.constant -1.45315206 : f32
    %264 = vector.broadcast %cst_91 : f32 to vector<8x64xf32>
    %265 = arith.addf %263, %264 : vector<8x64xf32>
    %266 = arith.mulf %265, %261 : vector<8x64xf32>
    %cst_92 = arith.constant 1.42141378 : f32
    %267 = vector.broadcast %cst_92 : f32 to vector<8x64xf32>
    %268 = arith.addf %266, %267 : vector<8x64xf32>
    %269 = arith.mulf %268, %261 : vector<8x64xf32>
    %cst_93 = arith.constant -0.284496725 : f32
    %270 = vector.broadcast %cst_93 : f32 to vector<8x64xf32>
    %271 = arith.addf %269, %270 : vector<8x64xf32>
    %272 = arith.mulf %271, %261 : vector<8x64xf32>
    %cst_94 = arith.constant 0.254829586 : f32
    %273 = vector.broadcast %cst_94 : f32 to vector<8x64xf32>
    %274 = arith.addf %272, %273 : vector<8x64xf32>
    %275 = arith.mulf %274, %261 : vector<8x64xf32>
    %cst_95 = arith.constant 0.000000e+00 : f32
    %276 = vector.broadcast %cst_95 : f32 to vector<8x64xf32>
    %277 = arith.subf %276, %255 : vector<8x64xf32>
    %278 = arith.mulf %277, %255 : vector<8x64xf32>
    %279 = math.exp %278 : vector<8x64xf32>
    %280 = arith.mulf %275, %279 : vector<8x64xf32>
    %cst_96 = arith.constant 1.000000e+00 : f32
    %281 = vector.broadcast %cst_96 : f32 to vector<8x64xf32>
    %282 = arith.subf %281, %280 : vector<8x64xf32>
    %283 = arith.mulf %254, %282 : vector<8x64xf32>
    %cst_97 = arith.constant 1.000000e+00 : f32
    %284 = vector.broadcast %cst_97 : f32 to vector<8x64xf32>
    %285 = arith.addf %284, %283 : vector<8x64xf32>
    %286 = arith.mulf %247, %285 : vector<8x64xf32>
    %cst_98 = arith.constant dense<0.000000e+00> : vector<8x32xf32>
    %287 = tpu.matmul %286, %166, %cst_98 {dimension_numbers = #tpu.dot_dimension_numbers<[1], [0], [0], [1], [0, 0, 1, 1], [], []>} : vector<8x64xf32>, vector<64x32xf32>, vector<8x32xf32> -> vector<8x32xf32>
    %288 = vector.broadcast %174 : vector<1x32xf32> to vector<8x32xf32>
    %289 = arith.addf %287, %288 : vector<8x32xf32>
    %290 = arith.addf %289, %242 : vector<8x32xf32>
    %cst_99 = arith.constant dense<0.000000e+00> : vector<8xf32>
    %291 = vector.multi_reduction <add>, %290, %cst_99 [1] : vector<8x32xf32> to vector<8xf32>
    %292 = vector.shape_cast %291 : vector<8xf32> to vector<8x1xf32>
    %cst_100 = arith.constant 3.200000e+01 : f32
    %293 = vector.broadcast %cst_100 : f32 to vector<8x1xf32>
    %294 = arith.divf %292, %293 : vector<8x1xf32>
    %295 = vector.broadcast %294 : vector<8x1xf32> to vector<8x32xf32>
    %296 = arith.subf %290, %295 : vector<8x32xf32>
    %297 = arith.mulf %296, %296 : vector<8x32xf32>
    %cst_101 = arith.constant dense<0.000000e+00> : vector<8xf32>
    %298 = vector.multi_reduction <add>, %297, %cst_101 [1] : vector<8x32xf32> to vector<8xf32>
    %299 = vector.shape_cast %298 : vector<8xf32> to vector<8x1xf32>
    %cst_102 = arith.constant 3.200000e+01 : f32
    %300 = vector.broadcast %cst_102 : f32 to vector<8x1xf32>
    %301 = arith.divf %299, %300 : vector<8x1xf32>
    %302 = vector.broadcast %294 : vector<8x1xf32> to vector<8x32xf32>
    %303 = arith.subf %290, %302 : vector<8x32xf32>
    %cst_103 = arith.constant 9.99999996E-13 : f32
    %304 = vector.broadcast %cst_103 : f32 to vector<8x1xf32>
    %305 = arith.addf %301, %304 : vector<8x1xf32>
    %306 = math.rsqrt %305 : vector<8x1xf32>
    %307 = vector.broadcast %306 : vector<8x1xf32> to vector<8x32xf32>
    %308 = arith.mulf %303, %307 : vector<8x32xf32>
    %309 = vector.broadcast %175 : vector<1x32xf32> to vector<8x32xf32>
    %310 = arith.mulf %308, %309 : vector<8x32xf32>
    %311 = vector.broadcast %176 : vector<1x32xf32> to vector<8x32xf32>
    %312 = arith.addf %310, %311 : vector<8x32xf32>
    %cst_104 = arith.constant dense<0.000000e+00> : vector<8x32xf32>
    %313 = tpu.matmul %1, %158, %cst_104 {dimension_numbers = #tpu.dot_dimension_numbers<[1], [0], [0], [1], [0, 0, 1, 1], [], []>} : vector<8x8xf32>, vector<8x32xf32>, vector<8x32xf32> -> vector<8x32xf32>
    %314 = arith.addf %313, %312 : vector<8x32xf32>
    %c0_105 = arith.constant 0 : index
    %c0_106 = arith.constant 0 : index
    %315 = vector.load %arg8[%c0_105, %c0_106] : memref<8x32xf32, #tpu.memory_space<vmem>>, vector<8x32xf32>
    tpu.vector_store %arg8[%c0_105, %c0_106], %314 {strides = array<i32>} : memref<8x32xf32, #tpu.memory_space<vmem>>, vector<8x32xf32>,
    return
  }
}

</mosaic_0001>

<llo_original>
// kernel: tpu_custom_call.1
$region0: #{tpu_custom_call.1}
  #allocation0 [shape = 'u32[]', space=smem, size = 0x4, offset = 0x4, fixed_abs, tag = 'smem constant byte address 0x4 - core index']
  #allocation1 [shape = 'u32[144,128]{1,0:T(1,128)}', space=vmem, size = 0x12000, scoped, tag = 'internal scratch']
  %s0 = inlined_call_operand.hbm [shape: f32[8,32], index: 0, kind: input, shape index: {}]
  %s1 = inlined_call_operand.hbm [shape: f32[8,8], index: 1, kind: input, shape index: {}]
  %s2 = inlined_call_operand.hbm [shape: f32[32,32], index: 2, kind: input, shape index: {}]
  %s3 = inlined_call_operand.vmem [shape: f32[2,32,96], index: 3, kind: input, shape index: {}]
  %s4 = inlined_call_operand.vmem [shape: f32[2,32,32], index: 4, kind: input, shape index: {}]
  %s5 = inlined_call_operand.vmem [shape: f32[2,32,64], index: 5, kind: input, shape index: {}]
  %s6 = inlined_call_operand.vmem [shape: f32[2,64,32], index: 6, kind: input, shape index: {}]
  %s7 = inlined_call_operand.hbm [shape: f32[2,8,96], index: 7, kind: input, shape index: {}]
  %s8 = inlined_call_operand.hbm [shape: f32[8,32], index: 8, kind: output, shape index: {}]
  %s9 = sld [smem:[#allocation0]]
  $region58: #{tpu_custom_call.1} parent=0
    _
  %s11 = ssub.s32 1, %s9
  %s12 = scalar_select 0, %s11, %s9
  $region1: #{tpu_custom_call.1} parent=0
    #allocation2 [shape = 'u8[4096]{0}', space=vmem, size = 0x1000, scoped, tag = 'input window, operand 0, single buffered']
    #allocation3 [shape = 's32[1]{0}', space=sflag, size = 0x4, scoped, tag = 'scoped memory for tpu_custom_call.1']
    #allocation4 [shape = 's32[1]{0}', space=sflag, size = 0x4, scoped, tag = 'scoped memory for tpu_custom_call.1']
    #allocation5 [shape = 'u8[4096]{0}', space=vmem, size = 0x1000, scoped, tag = 'input window, operand 1, single buffered']
    #allocation6 [shape = 's32[1]{0}', space=sflag, size = 0x4, scoped, tag = 'scoped memory for tpu_custom_call.1']
    #allocation7 [shape = 'u8[16384]{0}', space=vmem, size = 0x4000, scoped, tag = 'input window, operand 2, single buffered']
    #allocation8 [shape = 'u8[8192]{0}', space=vmem, size = 0x2000, scoped, tag = 'input window, operand 7, single buffered']
    #allocation9 [shape = 's32[1]{0}', space=sflag, size = 0x4, scoped, tag = 'scoped memory for tpu_custom_call.1']
    #allocation10 [shape = 'u8[4096]{0}', space=vmem, size = 0x1000, scoped, tag = 'output window, operand 0, single buffered']
    %13 = vsyncpa [#allocation3], 0
    %14 = vsyncpa [#allocation6], 0
    %15 = vsyncpa [#allocation9], 0
    %16 = vsyncpa [#allocation4], 0
    // Predicated region
    $region2: #{tpu_custom_call.1} parent=1 // pred_check
      _
    $region3: #{tpu_custom_call.1} parent=1 // pred_check_branch
      %18 = sbr.rel (0) target = $region5
    $region4: #{tpu_custom_call.1} parent=1 // pred_region
      %s20 = ssub.s32 128, 128
      %21 = vsyncadd [#allocation3], %s20
      %s23 = sshll.u32 [#allocation2], 4
      %s24 = int_to_ptr.vmem [resolvable:$true] %s23
      %26 = dma.hbm_to_vmem [thread:$0]  %s0, 128, %s24, [#allocation3]
    $region5: #{tpu_custom_call.1} parent=1 // pred_fallthru
      _
    // Predicated region
    $region6: #{tpu_custom_call.1} parent=1 // pred_check
      _
    $region7: #{tpu_custom_call.1} parent=1 // pred_check_branch
      %28 = sbr.rel (0) target = $region9
    $region8: #{tpu_custom_call.1} parent=1 // pred_region
      %s30 = ssub.s32 128, 128
      %31 = vsyncadd [#allocation6], %s30
      %s33 = sshll.u32 [#allocation5], 4
      %s34 = int_to_ptr.vmem [resolvable:$true] %s33
      %36 = dma.hbm_to_vmem [thread:$0]  %s1, 128, %s34, [#allocation6]
    $region9: #{tpu_custom_call.1} parent=1 // pred_fallthru
      _
    // Predicated region
    $region10: #{tpu_custom_call.1} parent=1 // pred_check
      _
    $region11: #{tpu_custom_call.1} parent=1 // pred_check_branch
      %38 = sbr.rel (0) target = $region13
    $region12: #{tpu_custom_call.1} parent=1 // pred_region
      %s40 = ssub.s32 512, 512
      %41 = vsyncadd [#allocation6], %s40
      %s42 = sshll.u32 [#allocation7], 4
      %s43 = int_to_ptr.vmem [resolvable:$true] %s42
      %48 = dma.hbm_to_vmem [thread:$0]  %s2, 512, %s43, [#allocation6], 128, 128, 8
    $region13: #{tpu_custom_call.1} parent=1 // pred_fallthru
      _
    // Predicated region
    $region14: #{tpu_custom_call.1} parent=1 // pred_check
      _
    $region15: #{tpu_custom_call.1} parent=1 // pred_check_branch
      %50 = sbr.rel (0) target = $region17
    $region16: #{tpu_custom_call.1} parent=1 // pred_region
      _
    $region17: #{tpu_custom_call.1} parent=1 // pred_fallthru
      _
    // Predicated region
    $region18: #{tpu_custom_call.1} parent=1 // pred_check
      _
    $region19: #{tpu_custom_call.1} parent=1 // pred_check_branch
      %52 = sbr.rel (0) target = $region21
    $region20: #{tpu_custom_call.1} parent=1 // pred_region
      _
    $region21: #{tpu_custom_call.1} parent=1 // pred_fallthru
      _
    // Predicated region
    $region22: #{tpu_custom_call.1} parent=1 // pred_check
      _
    $region23: #{tpu_custom_call.1} parent=1 // pred_check_branch
      %54 = sbr.rel (0) target = $region25
    $region24: #{tpu_custom_call.1} parent=1 // pred_region
      _
    $region25: #{tpu_custom_call.1} parent=1 // pred_fallthru
      _
    // Predicated region
    $region26: #{tpu_custom_call.1} parent=1 // pred_check
      _
    $region27: #{tpu_custom_call.1} parent=1 // pred_check_branch
      %56 = sbr.rel (0) target = $region29
    $region28: #{tpu_custom_call.1} parent=1 // pred_region
      _
    $region29: #{tpu_custom_call.1} parent=1 // pred_fallthru
      _
    // Predicated region
    $region30: #{tpu_custom_call.1} parent=1 // pred_check
      _
    $region31: #{tpu_custom_call.1} parent=1 // pred_check_branch
      %58 = sbr.rel (0) target = $region33
    $region32: #{tpu_custom_call.1} parent=1 // pred_region
      %s60 = ssub.s32 256, 256
      %61 = vsyncadd [#allocation9], %s60
      %s62 = sshll.u32 [#allocation8], 4
      %s63 = int_to_ptr.vmem [resolvable:$true] %s62
      %68 = dma.hbm_to_vmem [thread:$0]  %s7, 256, %s63, [#allocation9], 128, 128, 8
    $region33: #{tpu_custom_call.1} parent=1 // pred_fallthru
      _
    // Predicated region
    $region34: #{tpu_custom_call.1} parent=1 // pred_check
      _
    $region35: #{tpu_custom_call.1} parent=1 // pred_check_branch
      %70 = sbr.rel (0) target = $region37
    $region36: #{tpu_custom_call.1} parent=1 // pred_region
      %71 = dma.done [#allocation3], 128
    $region37: #{tpu_custom_call.1} parent=1 // pred_fallthru
      _
    // Predicated region
    $region38: #{tpu_custom_call.1} parent=1 // pred_check
      _
    $region39: #{tpu_custom_call.1} parent=1 // pred_check_branch
      %73 = sbr.rel (0) target = $region41
    $region40: #{tpu_custom_call.1} parent=1 // pred_region
      %74 = dma.done [#allocation6], 128
    $region41: #{tpu_custom_call.1} parent=1 // pred_fallthru
      _
    // Predicated region
    $region42: #{tpu_custom_call.1} parent=1 // pred_check
      _
    $region43: #{tpu_custom_call.1} parent=1 // pred_check_branch
      %76 = sbr.rel (0) target = $region45
    $region44: #{tpu_custom_call.1} parent=1 // pred_region
      %77 = dma.done [#allocation6], 512
    $region45: #{tpu_custom_call.1} parent=1 // pred_fallthru
      _
    // Predicated region
    $region46: #{tpu_custom_call.1} parent=1 // pred_check
      _
    $region47: #{tpu_custom_call.1} parent=1 // pred_check_branch
      %79 = sbr.rel (0) target = $region49
    $region48: #{tpu_custom_call.1} parent=1 // pred_region
      %80 = dma.done [#allocation9], 256
    $region49: #{tpu_custom_call.1} parent=1 // pred_fallthru
      _
    %v81 = vld [vmem:[#allocation2] sm:$0xff]
    %v82 = vld [vmem:[#allocation5] sm:$0xff]
    %v83 = vld [vmem:[#allocation7] sm:$0xff]
    %v84 = vld [vmem:[#allocation7 + $0x8] sm:$0xff]
    %v85 = vld [vmem:[#allocation7 + $0x10] sm:$0xff]
    %v86 = vld [vmem:[#allocation7 + $0x18] sm:$0xff]
    %v87 = vld [vmem:[%s3] sm:$0xff]
    %v88 = vld [vmem:[%s3 + $0x8] sm:$0xff]
    %v89 = vld [vmem:[%s3 + $0x10] sm:$0xff]
    %v90 = vld [vmem:[%s3 + $0x18] sm:$0xff]
    %v91 = vld [vmem:[%s4] sm:$0xff]
    %v92 = vld [vmem:[%s4 + $0x8] sm:$0xff]
    %v93 = vld [vmem:[%s4 + $0x10] sm:$0xff]
    %v94 = vld [vmem:[%s4 + $0x18] sm:$0xff]
    %v95 = vld [vmem:[%s5] sm:$0xff]
    %v96 = vld [vmem:[%s5 + $0x8] sm:$0xff]
    %v97 = vld [vmem:[%s5 + $0x10] sm:$0xff]
    %v98 = vld [vmem:[%s5 + $0x18] sm:$0xff]
    %v99 = vld [vmem:[%s6] sm:$0xff]
    %v100 = vld [vmem:[%s6 + $0x8] sm:$0xff]
    %v101 = vld [vmem:[%s6 + $0x10] sm:$0xff]
    %v102 = vld [vmem:[%s6 + $0x18] sm:$0xff]
    %v103 = vld [vmem:[%s6 + $0x20] sm:$0xff]
    %v104 = vld [vmem:[%s6 + $0x28] sm:$0xff]
    %v105 = vld [vmem:[%s6 + $0x30] sm:$0xff]
    %v106 = vld [vmem:[%s6 + $0x38] sm:$0xff]
    %v107 = vld [vmem:[#allocation8] sm:$0xff]
    %v108 = vlaneseq
    %v109 = vshrl.u32 %v108, 7
    %v110 = vsub.s32 0, %v109
    %v111 = vrot.slane %v107, %v110
    %vm112 = vcmask 261120
    %v114 = vsel %vm112, %v81, 0
    %116 = vmatprep.subr.mxu0 0.0
    %117 = vmatpush1.msra.mxu0 0.0
    %118 = vmatprep.subr.mxu0 0.0
    %119 = vmatpush1.msra.mxu0 0.0
    %120 = vmatprep.subr.mxu0 0.0
    %121 = vmatpush1.msra.mxu0 0.0
    %122 = vmatprep.subr.mxu0 0.0
    %123 = vmatpush1.msra.mxu0 0.0
    %124 = vmatprep.subr.mxu0 0.0
    %125 = vmatpush1.msra.mxu0 0.0
    %126 = vmatprep.subr.mxu0 0.0
    %127 = vmatpush1.msra.mxu0 0.0
    %128 = vmatprep.subr.mxu0 0.0
    %129 = vmatpush1.msra.mxu0 0.0
    %130 = vmatprep.subr.mxu0 0.0
    %131 = vmatpush1.msra.mxu0 0.0
    %132 = vmatprep.subr.mxu0 0.0
    %133 = vmatpush1.msra.mxu0 0.0
    %134 = vmatprep.subr.mxu0 0.0
    %135 = vmatpush1.msra.mxu0 0.0
    %136 = vmatprep.subr.mxu0 0.0
    %137 = vmatpush1.msra.mxu0 0.0
    %138 = vmatprep.subr.mxu0 0.0
    %139 = vmatpush1.msra.mxu0 0.0
    %140 = vmatprep.subr.mxu0 0.0
    %141 = vmatpush1.msra.mxu0 %v90
    %142 = vmatprep.subr.mxu0 0.0
    %143 = vmatpush1.msra.mxu0 %v89
    %144 = vmatprep.subr.mxu0 0.0
    %145 = vmatpush1.msra.mxu0 %v88
    %146 = vmatprep.subr.mxu0 0.0
    %147 = vmatpush1.msra.mxu0 %v87
    %148 = vmatprep.subr.mxu0 0.0
    %149 = vmatpush2.msra.mxu0 0.0
    %150 = vmatprep.subr.mxu0 0.0
    %151 = vmatpush2.msra.mxu0 0.0
    %152 = vmatprep.subr.mxu0 0.0
    %153 = vmatpush2.msra.mxu0 0.0
    %154 = vmatprep.subr.mxu0 0.0
    %155 = vmatpush2.msra.mxu0 0.0
    %156 = vmatprep.subr.mxu0 0.0
    %157 = vmatpush2.msra.mxu0 0.0
    %158 = vmatprep.subr.mxu0 0.0
    %159 = vmatpush2.msra.mxu0 0.0
    %160 = vmatprep.subr.mxu0 0.0
    %161 = vmatpush2.msra.mxu0 0.0
    %162 = vmatprep.subr.mxu0 0.0
    %163 = vmatpush2.msra.mxu0 0.0
    %164 = vmatprep.subr.mxu0 0.0
    %165 = vmatpush2.msra.mxu0 0.0
    %166 = vmatprep.subr.mxu0 0.0
    %167 = vmatpush2.msra.mxu0 0.0
    %168 = vmatprep.subr.mxu0 0.0
    %169 = vmatpush2.msra.mxu0 0.0
    %170 = vmatprep.subr.mxu0 0.0
    %171 = vmatpush2.msra.mxu0 0.0
    %172 = vmatprep.subr.mxu0 0.0
    %173 = vmatpush2.msra.mxu0 0.0
    %174 = vmatprep.subr.mxu0 0.0
    %175 = vmatpush2.msra.mxu0 0.0
    %176 = vmatprep.subr.mxu0 0.0
    %177 = vmatpush2.msra.mxu0 0.0
    %178 = vmatprep.subr.mxu0 0.0
    %179 = vmatpush2.msra.mxu0 0.0
    %180 = vmatprep.mubr.f32.mxu0 0.0
    %181 = vmatmul.mubr.f32.gmra.mxu0 %v114
    %v182 = vpop.f32.mrf.mxu0
    %v183 = vadd.f32 %v111, %v182
    %v184 = vpop.f32.mrf.mxu0
    %185 = vdwg.mxu0
    %187 = vrot.lane.b32.xlu0 %v183, 120
    %v188 = vpop.permute.xlu0 %187
    %189 = vrot.lane.b32.xlu0 %v183, 112
    %v190 = vpop.permute.xlu0 %189
    %191 = vrot.lane.b32.xlu0 %v183, 104
    %v192 = vpop.permute.xlu0 %191
    %193 = vrot.lane.b32.xlu0 %v183, 96
    %v194 = vpop.permute.xlu0 %193
    %195 = vrot.lane.b32.xlu0 %v188, 96
    %v196 = vpop.permute.xlu0 %195
    %197 = vrot.lane.b32.xlu0 %v190, 96
    %v198 = vpop.permute.xlu0 %197
    %199 = vrot.lane.b32.xlu0 %v192, 96
    %v200 = vpop.permute.xlu0 %199
    %vm201 = vcmask 64512
    %v202 = vsel %vm201, %v183, 0
    %v204 = vsel %vm201, %v188, 0
    %v206 = vsel %vm201, %v190, 0
    %v208 = vsel %vm201, %v192, 0
    %v210 = vsel %vm201, %v194, 0
    %v212 = vsel %vm201, %v196, 0
    %v214 = vsel %vm201, %v198, 0
    %v216 = vsel %vm201, %v200, 0
    %218 = vmatprep.subr.mxu0 0.0
    %219 = vmatpush1.xpose.msra.mxu0 0.0
    %220 = vmatprep.subr.mxu0 0.0
    %221 = vmatpush1.xpose.msra.mxu0 0.0
    %222 = vmatprep.subr.mxu0 0.0
    %223 = vmatpush1.xpose.msra.mxu0 0.0
    %224 = vmatprep.subr.mxu0 0.0
    %225 = vmatpush1.xpose.msra.mxu0 0.0
    %226 = vmatprep.subr.mxu0 0.0
    %227 = vmatpush1.xpose.msra.mxu0 0.0
    %228 = vmatprep.subr.mxu0 0.0
    %229 = vmatpush1.xpose.msra.mxu0 0.0
    %230 = vmatprep.subr.mxu0 0.0
    %231 = vmatpush1.xpose.msra.mxu0 0.0
    %232 = vmatprep.subr.mxu0 0.0
    %233 = vmatpush1.xpose.msra.mxu0 0.0
    %234 = vmatprep.subr.mxu0 0.0
    %235 = vmatpush1.xpose.msra.mxu0 0.0
    %236 = vmatprep.subr.mxu0 0.0
    %237 = vmatpush1.xpose.msra.mxu0 0.0
    %238 = vmatprep.subr.mxu0 0.0
    %239 = vmatpush1.xpose.msra.mxu0 0.0
    %240 = vmatprep.subr.mxu0 0.0
    %241 = vmatpush1.xpose.msra.mxu0 0.0
    %242 = vmatprep.subr.mxu0 0.0
    %243 = vmatpush1.xpose.msra.mxu0 %v216
    %244 = vmatprep.subr.mxu0 0.0
    %245 = vmatpush1.xpose.msra.mxu0 %v214
    %246 = vmatprep.subr.mxu0 0.0
    %247 = vmatpush1.xpose.msra.mxu0 %v212
    %248 = vmatprep.subr.mxu0 0.0
    %249 = vmatpush1.xpose.msra.mxu0 %v210
    %250 = vmatprep.subr.mxu0 0.0
    %251 = vmatpush2.xpose.msra.mxu0 0.0
    %252 = vmatprep.subr.mxu0 0.0
    %253 = vmatpush2.xpose.msra.mxu0 0.0
    %254 = vmatprep.subr.mxu0 0.0
    %255 = vmatpush2.xpose.msra.mxu0 0.0
    %256 = vmatprep.subr.mxu0 0.0
    %257 = vmatpush2.xpose.msra.mxu0 0.0
    %258 = vmatprep.subr.mxu0 0.0
    %259 = vmatpush2.xpose.msra.mxu0 0.0
    %260 = vmatprep.subr.mxu0 0.0
    %261 = vmatpush2.xpose.msra.mxu0 0.0
    %262 = vmatprep.subr.mxu0 0.0
    %263 = vmatpush2.xpose.msra.mxu0 0.0
    %264 = vmatprep.subr.mxu0 0.0
    %265 = vmatpush2.xpose.msra.mxu0 0.0
    %266 = vmatprep.subr.mxu0 0.0
    %267 = vmatpush2.xpose.msra.mxu0 0.0
    %268 = vmatprep.subr.mxu0 0.0
    %269 = vmatpush2.xpose.msra.mxu0 0.0
    %270 = vmatprep.subr.mxu0 0.0
    %271 = vmatpush2.xpose.msra.mxu0 0.0
    %272 = vmatprep.subr.mxu0 0.0
    %273 = vmatpush2.xpose.msra.mxu0 0.0
    %274 = vmatprep.subr.mxu0 0.0
    %275 = vmatpush2.xpose.msra.mxu0 0.0
    %276 = vmatprep.subr.mxu0 0.0
    %277 = vmatpush2.xpose.msra.mxu0 0.0
    %278 = vmatprep.subr.mxu0 0.0
    %279 = vmatpush2.xpose.msra.mxu0 0.0
    %280 = vmatprep.subr.mxu0 0.0
    %281 = vmatpush2.xpose.msra.mxu0 0.0
    %282 = vmatprep.mubr.f32.mxu0 0.0
    %283 = vmatmul.mubr.f32.gmra.mxu0 %v202
    %v284 = vpop.f32.mrf.mxu0
    %v285 = vadd.f32 0.0, %v284
    %v286 = vpop.f32.mrf.mxu0
    %287 = vmatprep.mubr.f32.mxu0 0.0
    %288 = vmatmul.mubr.f32.gmra.mxu0 %v204
    %v289 = vpop.f32.mrf.mxu0
    %v290 = vadd.f32 0.0, %v289
    %v291 = vpop.f32.mrf.mxu0
    %292 = vmatprep.mubr.f32.mxu0 0.0
    %293 = vmatmul.mubr.f32.gmra.mxu0 %v206
    %v294 = vpop.f32.mrf.mxu0
    %v295 = vadd.f32 0.0, %v294
    %v296 = vpop.f32.mrf.mxu0
    %297 = vmatprep.mubr.f32.mxu0 0.0
    %298 = vmatmul.mubr.f32.gmra.mxu0 %v208
    %v299 = vpop.f32.mrf.mxu0
    %v300 = vadd.f32 0.0, %v299
    %v301 = vpop.f32.mrf.mxu0
    %302 = vdwg.mxu0
    %v303 = vmul.f32 %v285, 0.35355338
    %v304 = vmul.f32 %v290, 0.35355338
    %v305 = vmul.f32 %v295, 0.35355338
    %v306 = vmul.f32 %v300, 0.35355338
    %v307 = vadd.f32 %v303, %v83
    %v308 = vadd.f32 %v304, %v84
    %v309 = vadd.f32 %v305, %v85
    %v310 = vadd.f32 %v306, %v86
    %v311 = vsel %vm112, %v307, -inf
    %312 = vmax.xlane.f32.xlu0 %v311
    %v313 = vpop.xlane.xlu0 %312
    %v314 = vsel %vm112, %v308, -inf
    %315 = vmax.xlane.f32.xlu0 %v314
    %v316 = vpop.xlane.xlu0 %315
    %v317 = vsel %vm112, %v309, -inf
    %318 = vmax.xlane.f32.xlu0 %v317
    %v319 = vpop.xlane.xlu0 %318
    %v320 = vsel %vm112, %v310, -inf
    %321 = vmax.xlane.f32.xlu0 %v320
    %v322 = vpop.xlane.xlu0 %321
    %v323 = vsub.f32 %v307, %v313
    %v324 = vsub.f32 %v308, %v316
    %v325 = vsub.f32 %v309, %v319
    %v326 = vsub.f32 %v310, %v322
    %v327 = vmul.f32 %v323, 1.442695
    %v328 = vpow.pop %v327
    %v329 = vmul.f32 %v324, 1.442695
    %v330 = vpow.pop %v329
    %v331 = vmul.f32 %v325, 1.442695
    %v332 = vpow.pop %v331
    %v333 = vmul.f32 %v326, 1.442695
    %v334 = vpow.pop %v333
    %v335 = vsel %vm112, %v328, 0.0
    %336 = vadd.xlane.f32.xlu0 %v335
    %v337 = vpop.xlane.xlu0 %336
    %v338 = vsel %vm112, %v330, 0.0
    %339 = vadd.xlane.f32.xlu0 %v338
    %v340 = vpop.xlane.xlu0 %339
    %v341 = vsel %vm112, %v332, 0.0
    %342 = vadd.xlane.f32.xlu0 %v341
    %v343 = vpop.xlane.xlu0 %342
    %v344 = vsel %vm112, %v334, 0.0
    %345 = vadd.xlane.f32.xlu0 %v344
    %v346 = vpop.xlane.xlu0 %345
    %v347 = vrcp.pop %v337
    %v348 = vmul.f32 %v328, %v347
    %v349 = vrcp.pop %v340
    %v350 = vmul.f32 %v330, %v349
    %v351 = vrcp.pop %v343
    %v352 = vmul.f32 %v332, %v351
    %v353 = vrcp.pop %v346
    %v354 = vmul.f32 %v334, %v353
    %355 = vrot.lane.b32.xlu0 %v183, 64
    %v356 = vpop.permute.xlu0 %355
    %357 = vrot.lane.b32.xlu0 %v188, 64
    %v358 = vpop.permute.xlu0 %357
    %359 = vrot.lane.b32.xlu0 %v190, 64
    %v360 = vpop.permute.xlu0 %359
    %361 = vrot.lane.b32.xlu0 %v192, 64
    %v362 = vpop.permute.xlu0 %361
    %v368 = vsel %vm112, %v348, 0
    %v371 = vsel %vm112, %v350, 0
    %v374 = vsel %vm112, %v352, 0
    %v377 = vsel %vm112, %v354, 0
    %379 = vmatprep.subr.mxu0 0.0
    %380 = vmatpush1.msra.mxu0 0.0
    %381 = vmatprep.subr.mxu0 0.0
    %382 = vmatpush1.msra.mxu0 0.0
    %383 = vmatprep.subr.mxu0 0.0
    %384 = vmatpush1.msra.mxu0 0.0
    %385 = vmatprep.subr.mxu0 0.0
    %386 = vmatpush1.msra.mxu0 0.0
    %387 = vmatprep.subr.mxu0 0.0
    %388 = vmatpush1.msra.mxu0 0.0
    %389 = vmatprep.subr.mxu0 0.0
    %390 = vmatpush1.msra.mxu0 0.0
    %391 = vmatprep.subr.mxu0 0.0
    %392 = vmatpush1.msra.mxu0 0.0
    %393 = vmatprep.subr.mxu0 0.0
    %394 = vmatpush1.msra.mxu0 0.0
    %395 = vmatprep.subr.mxu0 0.0
    %396 = vmatpush1.msra.mxu0 0.0
    %397 = vmatprep.subr.mxu0 0.0
    %398 = vmatpush1.msra.mxu0 0.0
    %399 = vmatprep.subr.mxu0 0.0
    %400 = vmatpush1.msra.mxu0 0.0
    %401 = vmatprep.subr.mxu0 0.0
    %402 = vmatpush1.msra.mxu0 0.0
    %403 = vmatprep.subr.mxu0 0.0
    %404 = vmatpush1.msra.mxu0 %v362
    %405 = vmatprep.subr.mxu0 0.0
    %406 = vmatpush1.msra.mxu0 %v360
    %407 = vmatprep.subr.mxu0 0.0
    %408 = vmatpush1.msra.mxu0 %v358
    %409 = vmatprep.subr.mxu0 0.0
    %410 = vmatpush1.msra.mxu0 %v356
    %411 = vmatprep.subr.mxu0 0.0
    %412 = vmatpush2.msra.mxu0 0.0
    %413 = vmatprep.subr.mxu0 0.0
    %414 = vmatpush2.msra.mxu0 0.0
    %415 = vmatprep.subr.mxu0 0.0
    %416 = vmatpush2.msra.mxu0 0.0
    %417 = vmatprep.subr.mxu0 0.0
    %418 = vmatpush2.msra.mxu0 0.0
    %419 = vmatprep.subr.mxu0 0.0
    %420 = vmatpush2.msra.mxu0 0.0
    %421 = vmatprep.subr.mxu0 0.0
    %422 = vmatpush2.msra.mxu0 0.0
    %423 = vmatprep.subr.mxu0 0.0
    %424 = vmatpush2.msra.mxu0 0.0
    %425 = vmatprep.subr.mxu0 0.0
    %426 = vmatpush2.msra.mxu0 0.0
    %427 = vmatprep.subr.mxu0 0.0
    %428 = vmatpush2.msra.mxu0 0.0
    %429 = vmatprep.subr.mxu0 0.0
    %430 = vmatpush2.msra.mxu0 0.0
    %431 = vmatprep.subr.mxu0 0.0
    %432 = vmatpush2.msra.mxu0 0.0
    %433 = vmatprep.subr.mxu0 0.0
    %434 = vmatpush2.msra.mxu0 0.0
    %435 = vmatprep.subr.mxu0 0.0
    %436 = vmatpush2.msra.mxu0 0.0
    %437 = vmatprep.subr.mxu0 0.0
    %438 = vmatpush2.msra.mxu0 0.0
    %439 = vmatprep.subr.mxu0 0.0
    %440 = vmatpush2.msra.mxu0 0.0
    %441 = vmatprep.subr.mxu0 0.0
    %442 = vmatpush2.msra.mxu0 0.0
    %443 = vmatprep.mubr.f32.mxu0 0.0
    %444 = vmatmul.mubr.f32.gmra.mxu0 %v368
    %v445 = vpop.f32.mrf.mxu0
    %v446 = vadd.f32 0.0, %v445
    %v447 = vpop.f32.mrf.mxu0
    %448 = vmatprep.mubr.f32.mxu0 0.0
    %449 = vmatmul.mubr.f32.gmra.mxu0 %v371
    %v450 = vpop.f32.mrf.mxu0
    %v451 = vadd.f32 0.0, %v450
    %v452 = vpop.f32.mrf.mxu0
    %453 = vmatprep.mubr.f32.mxu0 0.0
    %454 = vmatmul.mubr.f32.gmra.mxu0 %v374
    %v455 = vpop.f32.mrf.mxu0
    %v456 = vadd.f32 0.0, %v455
    %v457 = vpop.f32.mrf.mxu0
    %458 = vmatprep.mubr.f32.mxu0 0.0
    %459 = vmatmul.mubr.f32.gmra.mxu0 %v377
    %v460 = vpop.f32.mrf.mxu0
    %v461 = vadd.f32 0.0, %v460
    %v462 = vpop.f32.mrf.mxu0
    %463 = vdwg.mxu0
    %465 = vrot.lane.b32.xlu0 %v451, 8
    %v466 = vpop.permute.xlu0 %465
    %469 = vrot.lane.b32.xlu0 %v456, 16
    %v470 = vpop.permute.xlu0 %469
    %473 = vrot.lane.b32.xlu0 %v461, 24
    %v474 = vpop.permute.xlu0 %473
    %v476 = vsel %vm201, %v446, %v466
    %vm477 = vcmask 130048
    %v478 = vsel %vm477, %v476, %v470
    %vm479 = vcmask 195584
    %v480 = vsel %vm479, %v478, %v474
    %v481 = vlaneseq
    %v482 = vshrl.u32 %v481, 7
    %v483 = vsub.s32 2, %v482
    %v484 = vrot.slane %v107, %v483
    %v486 = vsel %vm112, %v480, 0
    %488 = vmatprep.subr.mxu0 0.0
    %489 = vmatpush1.msra.mxu0 0.0
    %490 = vmatprep.subr.mxu0 0.0
    %491 = vmatpush1.msra.mxu0 0.0
    %492 = vmatprep.subr.mxu0 0.0
    %493 = vmatpush1.msra.mxu0 0.0
    %494 = vmatprep.subr.mxu0 0.0
    %495 = vmatpush1.msra.mxu0 0.0
    %496 = vmatprep.subr.mxu0 0.0
    %497 = vmatpush1.msra.mxu0 0.0
    %498 = vmatprep.subr.mxu0 0.0
    %499 = vmatpush1.msra.mxu0 0.0
    %500 = vmatprep.subr.mxu0 0.0
    %501 = vmatpush1.msra.mxu0 0.0
    %502 = vmatprep.subr.mxu0 0.0
    %503 = vmatpush1.msra.mxu0 0.0
    %504 = vmatprep.subr.mxu0 0.0
    %505 = vmatpush1.msra.mxu0 0.0
    %506 = vmatprep.subr.mxu0 0.0
    %507 = vmatpush1.msra.mxu0 0.0
    %508 = vmatprep.subr.mxu0 0.0
    %509 = vmatpush1.msra.mxu0 0.0
    %510 = vmatprep.subr.mxu0 0.0
    %511 = vmatpush1.msra.mxu0 0.0
    %512 = vmatprep.subr.mxu0 0.0
    %513 = vmatpush1.msra.mxu0 %v94
    %514 = vmatprep.subr.mxu0 0.0
    %515 = vmatpush1.msra.mxu0 %v93
    %516 = vmatprep.subr.mxu0 0.0
    %517 = vmatpush1.msra.mxu0 %v92
    %518 = vmatprep.subr.mxu0 0.0
    %519 = vmatpush1.msra.mxu0 %v91
    %520 = vmatprep.subr.mxu0 0.0
    %521 = vmatpush2.msra.mxu0 0.0
    %522 = vmatprep.subr.mxu0 0.0
    %523 = vmatpush2.msra.mxu0 0.0
    %524 = vmatprep.subr.mxu0 0.0
    %525 = vmatpush2.msra.mxu0 0.0
    %526 = vmatprep.subr.mxu0 0.0
    %527 = vmatpush2.msra.mxu0 0.0
    %528 = vmatprep.subr.mxu0 0.0
    %529 = vmatpush2.msra.mxu0 0.0
    %530 = vmatprep.subr.mxu0 0.0
    %531 = vmatpush2.msra.mxu0 0.0
    %532 = vmatprep.subr.mxu0 0.0
    %533 = vmatpush2.msra.mxu0 0.0
    %534 = vmatprep.subr.mxu0 0.0
    %535 = vmatpush2.msra.mxu0 0.0
    %536 = vmatprep.subr.mxu0 0.0
    %537 = vmatpush2.msra.mxu0 0.0
    %538 = vmatprep.subr.mxu0 0.0
    %539 = vmatpush2.msra.mxu0 0.0
    %540 = vmatprep.subr.mxu0 0.0
    %541 = vmatpush2.msra.mxu0 0.0
    %542 = vmatprep.subr.mxu0 0.0
    %543 = vmatpush2.msra.mxu0 0.0
    %544 = vmatprep.subr.mxu0 0.0
    %545 = vmatpush2.msra.mxu0 0.0
    %546 = vmatprep.subr.mxu0 0.0
    %547 = vmatpush2.msra.mxu0 0.0
    %548 = vmatprep.subr.mxu0 0.0
    %549 = vmatpush2.msra.mxu0 0.0
    %550 = vmatprep.subr.mxu0 0.0
    %551 = vmatpush2.msra.mxu0 0.0
    %552 = vmatprep.mubr.f32.mxu0 0.0
    %553 = vmatmul.mubr.f32.gmra.mxu0 %v486
    %v554 = vpop.f32.mrf.mxu0
    %v555 = vadd.f32 %v484, %v554
    %v556 = vpop.f32.mrf.mxu0
    %557 = vdwg.mxu0
    %v558 = vadd.f32 %v555, %v81
    %v559 = vsel %vm112, %v558, 0.0
    %560 = vadd.xlane.f32.xlu0 %v559
    %v561 = vpop.xlane.xlu0 %560
    %v562 = vrcp.pop 32.0
    %v563 = vmul.f32 %v561, %v562
    %v564 = vsub.f32 %v558, %v563
    %v565 = vmul.f32 %v564, %v564
    %v566 = vsel %vm112, %v565, 0.0
    %567 = vadd.xlane.f32.xlu0 %v566
    %v568 = vpop.xlane.xlu0 %567
    %v569 = vmul.f32 %v568, %v562
    %v570 = vadd.f32 %v569, 1e-12
    %v571 = vrsqrt.pop %v570
    %v572 = vmul.f32 %v564, %v571
    %v573 = vlaneseq
    %v574 = vshrl.u32 %v573, 7
    %v575 = vsub.s32 3, %v574
    %v576 = vrot.slane %v107, %v575
    %v577 = vmul.f32 %v572, %v576
    %v578 = vlaneseq
    %v579 = vshrl.u32 %v578, 7
    %v580 = vsub.s32 4, %v579
    %v581 = vrot.slane %v107, %v580
    %v582 = vadd.f32 %v577, %v581
    %v583 = vlaneseq
    %v584 = vshrl.u32 %v583, 7
    %v585 = vsub.s32 1, %v584
    %v586 = vrot.slane %v107, %v585
    %v588 = vsel %vm112, %v582, 0
    %590 = vmatprep.subr.mxu0 0.0
    %591 = vmatpush1.msra.mxu0 0.0
    %592 = vmatprep.subr.mxu0 0.0
    %593 = vmatpush1.msra.mxu0 0.0
    %594 = vmatprep.subr.mxu0 0.0
    %595 = vmatpush1.msra.mxu0 0.0
    %596 = vmatprep.subr.mxu0 0.0
    %597 = vmatpush1.msra.mxu0 0.0
    %598 = vmatprep.subr.mxu0 0.0
    %599 = vmatpush1.msra.mxu0 0.0
    %600 = vmatprep.subr.mxu0 0.0
    %601 = vmatpush1.msra.mxu0 0.0
    %602 = vmatprep.subr.mxu0 0.0
    %603 = vmatpush1.msra.mxu0 0.0
    %604 = vmatprep.subr.mxu0 0.0
    %605 = vmatpush1.msra.mxu0 0.0
    %606 = vmatprep.subr.mxu0 0.0
    %607 = vmatpush1.msra.mxu0 0.0
    %608 = vmatprep.subr.mxu0 0.0
    %609 = vmatpush1.msra.mxu0 0.0
    %610 = vmatprep.subr.mxu0 0.0
    %611 = vmatpush1.msra.mxu0 0.0
    %612 = vmatprep.subr.mxu0 0.0
    %613 = vmatpush1.msra.mxu0 0.0
    %614 = vmatprep.subr.mxu0 0.0
    %615 = vmatpush1.msra.mxu0 %v98
    %616 = vmatprep.subr.mxu0 0.0
    %617 = vmatpush1.msra.mxu0 %v97
    %618 = vmatprep.subr.mxu0 0.0
    %619 = vmatpush1.msra.mxu0 %v96
    %620 = vmatprep.subr.mxu0 0.0
    %621 = vmatpush1.msra.mxu0 %v95
    %622 = vmatprep.subr.mxu0 0.0
    %623 = vmatpush2.msra.mxu0 0.0
    %624 = vmatprep.subr.mxu0 0.0
    %625 = vmatpush2.msra.mxu0 0.0
    %626 = vmatprep.subr.mxu0 0.0
    %627 = vmatpush2.msra.mxu0 0.0
    %628 = vmatprep.subr.mxu0 0.0
    %629 = vmatpush2.msra.mxu0 0.0
    %630 = vmatprep.subr.mxu0 0.0
    %631 = vmatpush2.msra.mxu0 0.0
    %632 = vmatprep.subr.mxu0 0.0
    %633 = vmatpush2.msra.mxu0 0.0
    %634 = vmatprep.subr.mxu0 0.0
    %635 = vmatpush2.msra.mxu0 0.0
    %636 = vmatprep.subr.mxu0 0.0
    %637 = vmatpush2.msra.mxu0 0.0
    %638 = vmatprep.subr.mxu0 0.0
    %639 = vmatpush2.msra.mxu0 0.0
    %640 = vmatprep.subr.mxu0 0.0
    %641 = vmatpush2.msra.mxu0 0.0
    %642 = vmatprep.subr.mxu0 0.0
    %643 = vmatpush2.msra.mxu0 0.0
    %644 = vmatprep.subr.mxu0 0.0
    %645 = vmatpush2.msra.mxu0 0.0
    %646 = vmatprep.subr.mxu0 0.0
    %647 = vmatpush2.msra.mxu0 0.0
    %648 = vmatprep.subr.mxu0 0.0
    %649 = vmatpush2.msra.mxu0 0.0
    %650 = vmatprep.subr.mxu0 0.0
    %651 = vmatpush2.msra.mxu0 0.0
    %652 = vmatprep.subr.mxu0 0.0
    %653 = vmatpush2.msra.mxu0 0.0
    %654 = vmatprep.mubr.f32.mxu0 0.0
    %655 = vmatmul.mubr.f32.gmra.mxu0 %v588
    %v656 = vpop.f32.mrf.mxu0
    %v657 = vadd.f32 %v586, %v656
    %v658 = vpop.f32.mrf.mxu0
    %659 = vdwg.mxu0
    %v660 = vmul.f32 %v657, 0.5
    %v661 = vmul.f32 %v657, 0.70710677
    %vm662 = vcmp.ge.f32.partialorder %v661, 0.0
    %v663 = vsel %vm662, 1.0, -1.0
    %v664 = vand.u32 2147483647, %v661
    %v665 = vmul.f32 %v664, 0.3275911
    %v666 = vadd.f32 %v665, 1.0
    %v667 = vrcp.pop %v666
    %v668 = vmul.f32 1.0, %v667
    %v669 = vmul.f32 %v668, 1.0614054
    %v670 = vadd.f32 %v669, -1.4531521
    %v671 = vmul.f32 %v670, %v668
    %v672 = vadd.f32 %v671, 1.4214138
    %v673 = vmul.f32 %v672, %v668
    %v674 = vadd.f32 %v673, -0.28449672
    %v675 = vmul.f32 %v674, %v668
    %v676 = vadd.f32 %v675, 0.2548296
    %v677 = vmul.f32 %v676, %v668
    %v678 = vsub.f32 0.0, %v664
    %v679 = vmul.f32 %v678, %v664
    %v680 = vmul.f32 %v679, 1.442695
    %v681 = vpow.pop %v680
    %v682 = vmul.f32 %v677, %v681
    %v683 = vsub.f32 1.0, %v682
    %v684 = vmul.f32 %v663, %v683
    %v685 = vadd.f32 %v684, 1.0
    %v686 = vmul.f32 %v660, %v685
    %v687 = vlaneseq
    %v688 = vshrl.u32 %v687, 7
    %v689 = vsub.s32 5, %v688
    %v690 = vrot.slane %v107, %v689
    %vm691 = vcmask 523264
    %v693 = vsel %vm691, %v686, 0
    %695 = vmatprep.subr.mxu0 0.0
    %696 = vmatpush1.msra.mxu0 0.0
    %697 = vmatprep.subr.mxu0 0.0
    %698 = vmatpush1.msra.mxu0 0.0
    %699 = vmatprep.subr.mxu0 0.0
    %700 = vmatpush1.msra.mxu0 0.0
    %701 = vmatprep.subr.mxu0 0.0
    %702 = vmatpush1.msra.mxu0 0.0
    %703 = vmatprep.subr.mxu0 0.0
    %704 = vmatpush1.msra.mxu0 0.0
    %705 = vmatprep.subr.mxu0 0.0
    %706 = vmatpush1.msra.mxu0 0.0
    %707 = vmatprep.subr.mxu0 0.0
    %708 = vmatpush1.msra.mxu0 0.0
    %709 = vmatprep.subr.mxu0 0.0
    %710 = vmatpush1.msra.mxu0 0.0
    %711 = vmatprep.subr.mxu0 0.0
    %712 = vmatpush1.msra.mxu0 %v106
    %713 = vmatprep.subr.mxu0 0.0
    %714 = vmatpush1.msra.mxu0 %v105
    %715 = vmatprep.subr.mxu0 0.0
    %716 = vmatpush1.msra.mxu0 %v104
    %717 = vmatprep.subr.mxu0 0.0
    %718 = vmatpush1.msra.mxu0 %v103
    %719 = vmatprep.subr.mxu0 0.0
    %720 = vmatpush1.msra.mxu0 %v102
    %721 = vmatprep.subr.mxu0 0.0
    %722 = vmatpush1.msra.mxu0 %v101
    %723 = vmatprep.subr.mxu0 0.0
    %724 = vmatpush1.msra.mxu0 %v100
    %725 = vmatprep.subr.mxu0 0.0
    %726 = vmatpush1.msra.mxu0 %v99
    %727 = vmatprep.subr.mxu0 0.0
    %728 = vmatpush2.msra.mxu0 0.0
    %729 = vmatprep.subr.mxu0 0.0
    %730 = vmatpush2.msra.mxu0 0.0
    %731 = vmatprep.subr.mxu0 0.0
    %732 = vmatpush2.msra.mxu0 0.0
    %733 = vmatprep.subr.mxu0 0.0
    %734 = vmatpush2.msra.mxu0 0.0
    %735 = vmatprep.subr.mxu0 0.0
    %736 = vmatpush2.msra.mxu0 0.0
    %737 = vmatprep.subr.mxu0 0.0
    %738 = vmatpush2.msra.mxu0 0.0
    %739 = vmatprep.subr.mxu0 0.0
    %740 = vmatpush2.msra.mxu0 0.0
    %741 = vmatprep.subr.mxu0 0.0
    %742 = vmatpush2.msra.mxu0 0.0
    %743 = vmatprep.subr.mxu0 0.0
    %744 = vmatpush2.msra.mxu0 0.0
    %745 = vmatprep.subr.mxu0 0.0
    %746 = vmatpush2.msra.mxu0 0.0
    %747 = vmatprep.subr.mxu0 0.0
    %748 = vmatpush2.msra.mxu0 0.0
    %749 = vmatprep.subr.mxu0 0.0
    %750 = vmatpush2.msra.mxu0 0.0
    %751 = vmatprep.subr.mxu0 0.0
    %752 = vmatpush2.msra.mxu0 0.0
    %753 = vmatprep.subr.mxu0 0.0
    %754 = vmatpush2.msra.mxu0 0.0
    %755 = vmatprep.subr.mxu0 0.0
    %756 = vmatpush2.msra.mxu0 0.0
    %757 = vmatprep.subr.mxu0 0.0
    %758 = vmatpush2.msra.mxu0 0.0
    %759 = vmatprep.mubr.f32.mxu0 0.0
    %760 = vmatmul.mubr.f32.gmra.mxu0 %v693
    %v761 = vpop.f32.mrf.mxu0
    %v762 = vadd.f32 %v690, %v761
    %v763 = vpop.f32.mrf.mxu0
    %764 = vdwg.mxu0
    %v765 = vadd.f32 %v762, %v582
    %v766 = vsel %vm112, %v765, 0.0
    %767 = vadd.xlane.f32.xlu0 %v766
    %v768 = vpop.xlane.xlu0 %767
    %v769 = vmul.f32 %v768, %v562
    %v770 = vsub.f32 %v765, %v769
    %v771 = vmul.f32 %v770, %v770
    %v772 = vsel %vm112, %v771, 0.0
    %773 = vadd.xlane.f32.xlu0 %v772
    %v774 = vpop.xlane.xlu0 %773
    %v775 = vmul.f32 %v774, %v562
    %v776 = vadd.f32 %v775, 1e-12
    %v777 = vrsqrt.pop %v776
    %v778 = vmul.f32 %v770, %v777
    %v779 = vlaneseq
    %v780 = vshrl.u32 %v779, 7
    %v781 = vsub.s32 6, %v780
    %v782 = vrot.slane %v107, %v781
    %v783 = vmul.f32 %v778, %v782
    %v784 = vlaneseq
    %v785 = vshrl.u32 %v784, 7
    %v786 = vsub.s32 7, %v785
    %v787 = vrot.slane %v107, %v786
    %v788 = vadd.f32 %v783, %v787
    %v790 = vsel %vm201, %v82, 0
    %792 = vmatprep.subr.mxu0 0.0
    %793 = vmatpush1.msra.mxu0 0.0
    %794 = vmatprep.subr.mxu0 0.0
    %795 = vmatpush1.msra.mxu0 0.0
    %796 = vmatprep.subr.mxu0 0.0
    %797 = vmatpush1.msra.mxu0 0.0
    %798 = vmatprep.subr.mxu0 0.0
    %799 = vmatpush1.msra.mxu0 0.0
    %800 = vmatprep.subr.mxu0 0.0
    %801 = vmatpush1.msra.mxu0 0.0
    %802 = vmatprep.subr.mxu0 0.0
    %803 = vmatpush1.msra.mxu0 0.0
    %804 = vmatprep.subr.mxu0 0.0
    %805 = vmatpush1.msra.mxu0 0.0
    %806 = vmatprep.subr.mxu0 0.0
    %807 = vmatpush1.msra.mxu0 0.0
    %808 = vmatprep.subr.mxu0 0.0
    %809 = vmatpush1.msra.mxu0 0.0
    %810 = vmatprep.subr.mxu0 0.0
    %811 = vmatpush1.msra.mxu0 0.0
    %812 = vmatprep.subr.mxu0 0.0
    %813 = vmatpush1.msra.mxu0 0.0
    %814 = vmatprep.subr.mxu0 0.0
    %815 = vmatpush1.msra.mxu0 0.0
    %816 = vmatprep.subr.mxu0 0.0
    %817 = vmatpush1.msra.mxu0 0.0
    %818 = vmatprep.subr.mxu0 0.0
    %819 = vmatpush1.msra.mxu0 0.0
    %820 = vmatprep.subr.mxu0 0.0
    %821 = vmatpush1.msra.mxu0 0.0
    %822 = vmatprep.subr.mxu0 0.0
    %823 = vmatpush1.msra.mxu0 %v81
    %824 = vmatprep.subr.mxu0 0.0
    %825 = vmatpush2.msra.mxu0 0.0
    %826 = vmatprep.subr.mxu0 0.0
    %827 = vmatpush2.msra.mxu0 0.0
    %828 = vmatprep.subr.mxu0 0.0
    %829 = vmatpush2.msra.mxu0 0.0
    %830 = vmatprep.subr.mxu0 0.0
    %831 = vmatpush2.msra.mxu0 0.0
    %832 = vmatprep.subr.mxu0 0.0
    %833 = vmatpush2.msra.mxu0 0.0
    %834 = vmatprep.subr.mxu0 0.0
    %835 = vmatpush2.msra.mxu0 0.0
    %836 = vmatprep.subr.mxu0 0.0
    %837 = vmatpush2.msra.mxu0 0.0
    %838 = vmatprep.subr.mxu0 0.0
    %839 = vmatpush2.msra.mxu0 0.0
    %840 = vmatprep.subr.mxu0 0.0
    %841 = vmatpush2.msra.mxu0 0.0
    %842 = vmatprep.subr.mxu0 0.0
    %843 = vmatpush2.msra.mxu0 0.0
    %844 = vmatprep.subr.mxu0 0.0
    %845 = vmatpush2.msra.mxu0 0.0
    %846 = vmatprep.subr.mxu0 0.0
    %847 = vmatpush2.msra.mxu0 0.0
    %848 = vmatprep.subr.mxu0 0.0
    %849 = vmatpush2.msra.mxu0 0.0
    %850 = vmatprep.subr.mxu0 0.0
    %851 = vmatpush2.msra.mxu0 0.0
    %852 = vmatprep.subr.mxu0 0.0
    %853 = vmatpush2.msra.mxu0 0.0
    %854 = vmatprep.subr.mxu0 0.0
    %855 = vmatpush2.msra.mxu0 0.0
    %856 = vmatprep.mubr.f32.mxu0 0.0
    %857 = vmatmul.mubr.f32.gmra.mxu0 %v790
    %v858 = vpop.f32.mrf.mxu0
    %v859 = vadd.f32 %v788, %v858
    %v860 = vpop.f32.mrf.mxu0
    %861 = vdwg.mxu0
    %s862 = scalar_lea.vmem %s3, 32
    %v863 = vld [vmem:[%s862] sm:$0xff]
    %v864 = vld [vmem:[%s862 + $0x8] sm:$0xff]
    %v865 = vld [vmem:[%s862 + $0x10] sm:$0xff]
    %v866 = vld [vmem:[%s862 + $0x18] sm:$0xff]
    %s867 = scalar_lea.vmem %s4, 32
    %v868 = vld [vmem:[%s867] sm:$0xff]
    %v869 = vld [vmem:[%s867 + $0x8] sm:$0xff]
    %v870 = vld [vmem:[%s867 + $0x10] sm:$0xff]
    %v871 = vld [vmem:[%s867 + $0x18] sm:$0xff]
    %s872 = scalar_lea.vmem %s5, 32
    %v873 = vld [vmem:[%s872] sm:$0xff]
    %v874 = vld [vmem:[%s872 + $0x8] sm:$0xff]
    %v875 = vld [vmem:[%s872 + $0x10] sm:$0xff]
    %v876 = vld [vmem:[%s872 + $0x18] sm:$0xff]
    %s877 = scalar_lea.vmem %s6, 64
    %v878 = vld [vmem:[%s877] sm:$0xff]
    %v879 = vld [vmem:[%s877 + $0x8] sm:$0xff]
    %v880 = vld [vmem:[%s877 + $0x10] sm:$0xff]
    %v881 = vld [vmem:[%s877 + $0x18] sm:$0xff]
    %v882 = vld [vmem:[%s877 + $0x20] sm:$0xff]
    %v883 = vld [vmem:[%s877 + $0x28] sm:$0xff]
    %v884 = vld [vmem:[%s877 + $0x30] sm:$0xff]
    %v885 = vld [vmem:[%s877 + $0x38] sm:$0xff]
    %s886 = scalar_lea.vmem [#allocation8], 8
    %v887 = vld [vmem:[%s886] sm:$0xff]
    %v888 = vlaneseq
    %v889 = vshrl.u32 %v888, 7
    %v890 = vsub.s32 0, %v889
    %v891 = vrot.slane %v887, %v890
    %v893 = vsel %vm112, %v859, 0
    %895 = vmatprep.subr.mxu0 0.0
    %896 = vmatpush1.msra.mxu0 0.0
    %897 = vmatprep.subr.mxu0 0.0
    %898 = vmatpush1.msra.mxu0 0.0
    %899 = vmatprep.subr.mxu0 0.0
    %900 = vmatpush1.msra.mxu0 0.0
    %901 = vmatprep.subr.mxu0 0.0
    %902 = vmatpush1.msra.mxu0 0.0
    %903 = vmatprep.subr.mxu0 0.0
    %904 = vmatpush1.msra.mxu0 0.0
    %905 = vmatprep.subr.mxu0 0.0
    %906 = vmatpush1.msra.mxu0 0.0
    %907 = vmatprep.subr.mxu0 0.0
    %908 = vmatpush1.msra.mxu0 0.0
    %909 = vmatprep.subr.mxu0 0.0
    %910 = vmatpush1.msra.mxu0 0.0
    %911 = vmatprep.subr.mxu0 0.0
    %912 = vmatpush1.msra.mxu0 0.0
    %913 = vmatprep.subr.mxu0 0.0
    %914 = vmatpush1.msra.mxu0 0.0
    %915 = vmatprep.subr.mxu0 0.0
    %916 = vmatpush1.msra.mxu0 0.0
    %917 = vmatprep.subr.mxu0 0.0
    %918 = vmatpush1.msra.mxu0 0.0
    %919 = vmatprep.subr.mxu0 0.0
    %920 = vmatpush1.msra.mxu0 %v866
    %921 = vmatprep.subr.mxu0 0.0
    %922 = vmatpush1.msra.mxu0 %v865
    %923 = vmatprep.subr.mxu0 0.0
    %924 = vmatpush1.msra.mxu0 %v864
    %925 = vmatprep.subr.mxu0 0.0
    %926 = vmatpush1.msra.mxu0 %v863
    %927 = vmatprep.subr.mxu0 0.0
    %928 = vmatpush2.msra.mxu0 0.0
    %929 = vmatprep.subr.mxu0 0.0
    %930 = vmatpush2.msra.mxu0 0.0
    %931 = vmatprep.subr.mxu0 0.0
    %932 = vmatpush2.msra.mxu0 0.0
    %933 = vmatprep.subr.mxu0 0.0
    %934 = vmatpush2.msra.mxu0 0.0
    %935 = vmatprep.subr.mxu0 0.0
    %936 = vmatpush2.msra.mxu0 0.0
    %937 = vmatprep.subr.mxu0 0.0
    %938 = vmatpush2.msra.mxu0 0.0
    %939 = vmatprep.subr.mxu0 0.0
    %940 = vmatpush2.msra.mxu0 0.0
    %941 = vmatprep.subr.mxu0 0.0
    %942 = vmatpush2.msra.mxu0 0.0
    %943 = vmatprep.subr.mxu0 0.0
    %944 = vmatpush2.msra.mxu0 0.0
    %945 = vmatprep.subr.mxu0 0.0
    %946 = vmatpush2.msra.mxu0 0.0
    %947 = vmatprep.subr.mxu0 0.0
    %948 = vmatpush2.msra.mxu0 0.0
    %949 = vmatprep.subr.mxu0 0.0
    %950 = vmatpush2.msra.mxu0 0.0
    %951 = vmatprep.subr.mxu0 0.0
    %952 = vmatpush2.msra.mxu0 0.0
    %953 = vmatprep.subr.mxu0 0.0
    %954 = vmatpush2.msra.mxu0 0.0
    %955 = vmatprep.subr.mxu0 0.0
    %956 = vmatpush2.msra.mxu0 0.0
    %957 = vmatprep.subr.mxu0 0.0
    %958 = vmatpush2.msra.mxu0 0.0
    %959 = vmatprep.mubr.f32.mxu0 0.0
    %960 = vmatmul.mubr.f32.gmra.mxu0 %v893
    %v961 = vpop.f32.mrf.mxu0
    %v962 = vadd.f32 %v891, %v961
    %v963 = vpop.f32.mrf.mxu0
    %964 = vdwg.mxu0
    %966 = vrot.lane.b32.xlu0 %v962, 120
    %v967 = vpop.permute.xlu0 %966
    %968 = vrot.lane.b32.xlu0 %v962, 112
    %v969 = vpop.permute.xlu0 %968
    %970 = vrot.lane.b32.xlu0 %v962, 104
    %v971 = vpop.permute.xlu0 %970
    %972 = vrot.lane.b32.xlu0 %v962, 96
    %v973 = vpop.permute.xlu0 %972
    %974 = vrot.lane.b32.xlu0 %v967, 96
    %v975 = vpop.permute.xlu0 %974
    %976 = vrot.lane.b32.xlu0 %v969, 96
    %v977 = vpop.permute.xlu0 %976
    %978 = vrot.lane.b32.xlu0 %v971, 96
    %v979 = vpop.permute.xlu0 %978
    %v980 = vsel %vm201, %v962, 0
    %v982 = vsel %vm201, %v967, 0
    %v984 = vsel %vm201, %v969, 0
    %v986 = vsel %vm201, %v971, 0
    %v988 = vsel %vm201, %v973, 0
    %v990 = vsel %vm201, %v975, 0
    %v992 = vsel %vm201, %v977, 0
    %v994 = vsel %vm201, %v979, 0
    %996 = vmatprep.subr.mxu0 0.0
    %997 = vmatpush1.xpose.msra.mxu0 0.0
    %998 = vmatprep.subr.mxu0 0.0
    %999 = vmatpush1.xpose.msra.mxu0 0.0
    %1000 = vmatprep.subr.mxu0 0.0
    %1001 = vmatpush1.xpose.msra.mxu0 0.0
    %1002 = vmatprep.subr.mxu0 0.0
    %1003 = vmatpush1.xpose.msra.mxu0 0.0
    %1004 = vmatprep.subr.mxu0 0.0
    %1005 = vmatpush1.xpose.msra.mxu0 0.0
    %1006 = vmatprep.subr.mxu0 0.0
    %1007 = vmatpush1.xpose.msra.mxu0 0.0
    %1008 = vmatprep.subr.mxu0 0.0
    %1009 = vmatpush1.xpose.msra.mxu0 0.0
    %1010 = vmatprep.subr.mxu0 0.0
    %1011 = vmatpush1.xpose.msra.mxu0 0.0
    %1012 = vmatprep.subr.mxu0 0.0
    %1013 = vmatpush1.xpose.msra.mxu0 0.0
    %1014 = vmatprep.subr.mxu0 0.0
    %1015 = vmatpush1.xpose.msra.mxu0 0.0
    %1016 = vmatprep.subr.mxu0 0.0
    %1017 = vmatpush1.xpose.msra.mxu0 0.0
    %1018 = vmatprep.subr.mxu0 0.0
    %1019 = vmatpush1.xpose.msra.mxu0 0.0
    %1020 = vmatprep.subr.mxu0 0.0
    %1021 = vmatpush1.xpose.msra.mxu0 %v994
    %1022 = vmatprep.subr.mxu0 0.0
    %1023 = vmatpush1.xpose.msra.mxu0 %v992
    %1024 = vmatprep.subr.mxu0 0.0
    %1025 = vmatpush1.xpose.msra.mxu0 %v990
    %1026 = vmatprep.subr.mxu0 0.0
    %1027 = vmatpush1.xpose.msra.mxu0 %v988
    %1028 = vmatprep.subr.mxu0 0.0
    %1029 = vmatpush2.xpose.msra.mxu0 0.0
    %1030 = vmatprep.subr.mxu0 0.0
    %1031 = vmatpush2.xpose.msra.mxu0 0.0
    %1032 = vmatprep.subr.mxu0 0.0
    %1033 = vmatpush2.xpose.msra.mxu0 0.0
    %1034 = vmatprep.subr.mxu0 0.0
    %1035 = vmatpush2.xpose.msra.mxu0 0.0
    %1036 = vmatprep.subr.mxu0 0.0
    %1037 = vmatpush2.xpose.msra.mxu0 0.0
    %1038 = vmatprep.subr.mxu0 0.0
    %1039 = vmatpush2.xpose.msra.mxu0 0.0
    %1040 = vmatprep.subr.mxu0 0.0
    %1041 = vmatpush2.xpose.msra.mxu0 0.0
    %1042 = vmatprep.subr.mxu0 0.0
    %1043 = vmatpush2.xpose.msra.mxu0 0.0
    %1044 = vmatprep.subr.mxu0 0.0
    %1045 = vmatpush2.xpose.msra.mxu0 0.0
    %1046 = vmatprep.subr.mxu0 0.0
    %1047 = vmatpush2.xpose.msra.mxu0 0.0
    %1048 = vmatprep.subr.mxu0 0.0
    %1049 = vmatpush2.xpose.msra.mxu0 0.0
    %1050 = vmatprep.subr.mxu0 0.0
    %1051 = vmatpush2.xpose.msra.mxu0 0.0
    %1052 = vmatprep.subr.mxu0 0.0
    %1053 = vmatpush2.xpose.msra.mxu0 0.0
    %1054 = vmatprep.subr.mxu0 0.0
    %1055 = vmatpush2.xpose.msra.mxu0 0.0
    %1056 = vmatprep.subr.mxu0 0.0
    %1057 = vmatpush2.xpose.msra.mxu0 0.0
    %1058 = vmatprep.subr.mxu0 0.0
    %1059 = vmatpush2.xpose.msra.mxu0 0.0
    %1060 = vmatprep.mubr.f32.mxu0 0.0
    %1061 = vmatmul.mubr.f32.gmra.mxu0 %v980
    %v1062 = vpop.f32.mrf.mxu0
    %v1063 = vadd.f32 0.0, %v1062
    %v1064 = vpop.f32.mrf.mxu0
    %1065 = vmatprep.mubr.f32.mxu0 0.0
    %1066 = vmatmul.mubr.f32.gmra.mxu0 %v982
    %v1067 = vpop.f32.mrf.mxu0
    %v1068 = vadd.f32 0.0, %v1067
    %v1069 = vpop.f32.mrf.mxu0
    %1070 = vmatprep.mubr.f32.mxu0 0.0
    %1071 = vmatmul.mubr.f32.gmra.mxu0 %v984
    %v1072 = vpop.f32.mrf.mxu0
    %v1073 = vadd.f32 0.0, %v1072
    %v1074 = vpop.f32.mrf.mxu0
    %1075 = vmatprep.mubr.f32.mxu0 0.0
    %1076 = vmatmul.mubr.f32.gmra.mxu0 %v986
    %v1077 = vpop.f32.mrf.mxu0
    %v1078 = vadd.f32 0.0, %v1077
    %v1079 = vpop.f32.mrf.mxu0
    %1080 = vdwg.mxu0
    %v1081 = vmul.f32 %v1063, 0.35355338
    %v1082 = vmul.f32 %v1068, 0.35355338
    %v1083 = vmul.f32 %v1073, 0.35355338
    %v1084 = vmul.f32 %v1078, 0.35355338
    %v1085 = vadd.f32 %v1081, %v83
    %v1086 = vadd.f32 %v1082, %v84
    %v1087 = vadd.f32 %v1083, %v85
    %v1088 = vadd.f32 %v1084, %v86
    %v1089 = vsel %vm112, %v1085, -inf
    %1090 = vmax.xlane.f32.xlu0 %v1089
    %v1091 = vpop.xlane.xlu0 %1090
    %v1092 = vsel %vm112, %v1086, -inf
    %1093 = vmax.xlane.f32.xlu0 %v1092
    %v1094 = vpop.xlane.xlu0 %1093
    %v1095 = vsel %vm112, %v1087, -inf
    %1096 = vmax.xlane.f32.xlu0 %v1095
    %v1097 = vpop.xlane.xlu0 %1096
    %v1098 = vsel %vm112, %v1088, -inf
    %1099 = vmax.xlane.f32.xlu0 %v1098
    %v1100 = vpop.xlane.xlu0 %1099
    %v1101 = vsub.f32 %v1085, %v1091
    %v1102 = vsub.f32 %v1086, %v1094
    %v1103 = vsub.f32 %v1087, %v1097
    %v1104 = vsub.f32 %v1088, %v1100
    %v1105 = vmul.f32 %v1101, 1.442695
    %v1106 = vpow.pop %v1105
    %v1107 = vmul.f32 %v1102, 1.442695
    %v1108 = vpow.pop %v1107
    %v1109 = vmul.f32 %v1103, 1.442695
    %v1110 = vpow.pop %v1109
    %v1111 = vmul.f32 %v1104, 1.442695
    %v1112 = vpow.pop %v1111
    %v1113 = vsel %vm112, %v1106, 0.0
    %1114 = vadd.xlane.f32.xlu0 %v1113
    %v1115 = vpop.xlane.xlu0 %1114
    %v1116 = vsel %vm112, %v1108, 0.0
    %1117 = vadd.xlane.f32.xlu0 %v1116
    %v1118 = vpop.xlane.xlu0 %1117
    %v1119 = vsel %vm112, %v1110, 0.0
    %1120 = vadd.xlane.f32.xlu0 %v1119
    %v1121 = vpop.xlane.xlu0 %1120
    %v1122 = vsel %vm112, %v1112, 0.0
    %1123 = vadd.xlane.f32.xlu0 %v1122
    %v1124 = vpop.xlane.xlu0 %1123
    %v1125 = vrcp.pop %v1115
    %v1126 = vmul.f32 %v1106, %v1125
    %v1127 = vrcp.pop %v1118
    %v1128 = vmul.f32 %v1108, %v1127
    %v1129 = vrcp.pop %v1121
    %v1130 = vmul.f32 %v1110, %v1129
    %v1131 = vrcp.pop %v1124
    %v1132 = vmul.f32 %v1112, %v1131
    %1133 = vrot.lane.b32.xlu0 %v962, 64
    %v1134 = vpop.permute.xlu0 %1133
    %1135 = vrot.lane.b32.xlu0 %v967, 64
    %v1136 = vpop.permute.xlu0 %1135
    %1137 = vrot.lane.b32.xlu0 %v969, 64
    %v1138 = vpop.permute.xlu0 %1137
    %1139 = vrot.lane.b32.xlu0 %v971, 64
    %v1140 = vpop.permute.xlu0 %1139
    %v1146 = vsel %vm112, %v1126, 0
    %v1149 = vsel %vm112, %v1128, 0
    %v1152 = vsel %vm112, %v1130, 0
    %v1155 = vsel %vm112, %v1132, 0
    %1157 = vmatprep.subr.mxu0 0.0
    %1158 = vmatpush1.msra.mxu0 0.0
    %1159 = vmatprep.subr.mxu0 0.0
    %1160 = vmatpush1.msra.mxu0 0.0
    %1161 = vmatprep.subr.mxu0 0.0
    %1162 = vmatpush1.msra.mxu0 0.0
    %1163 = vmatprep.subr.mxu0 0.0
    %1164 = vmatpush1.msra.mxu0 0.0
    %1165 = vmatprep.subr.mxu0 0.0
    %1166 = vmatpush1.msra.mxu0 0.0
    %1167 = vmatprep.subr.mxu0 0.0
    %1168 = vmatpush1.msra.mxu0 0.0
    %1169 = vmatprep.subr.mxu0 0.0
    %1170 = vmatpush1.msra.mxu0 0.0
    %1171 = vmatprep.subr.mxu0 0.0
    %1172 = vmatpush1.msra.mxu0 0.0
    %1173 = vmatprep.subr.mxu0 0.0
    %1174 = vmatpush1.msra.mxu0 0.0
    %1175 = vmatprep.subr.mxu0 0.0
    %1176 = vmatpush1.msra.mxu0 0.0
    %1177 = vmatprep.subr.mxu0 0.0
    %1178 = vmatpush1.msra.mxu0 0.0
    %1179 = vmatprep.subr.mxu0 0.0
    %1180 = vmatpush1.msra.mxu0 0.0
    %1181 = vmatprep.subr.mxu0 0.0
    %1182 = vmatpush1.msra.mxu0 %v1140
    %1183 = vmatprep.subr.mxu0 0.0
    %1184 = vmatpush1.msra.mxu0 %v1138
    %1185 = vmatprep.subr.mxu0 0.0
    %1186 = vmatpush1.msra.mxu0 %v1136
    %1187 = vmatprep.subr.mxu0 0.0
    %1188 = vmatpush1.msra.mxu0 %v1134
    %1189 = vmatprep.subr.mxu0 0.0
    %1190 = vmatpush2.msra.mxu0 0.0
    %1191 = vmatprep.subr.mxu0 0.0
    %1192 = vmatpush2.msra.mxu0 0.0
    %1193 = vmatprep.subr.mxu0 0.0
    %1194 = vmatpush2.msra.mxu0 0.0
    %1195 = vmatprep.subr.mxu0 0.0
    %1196 = vmatpush2.msra.mxu0 0.0
    %1197 = vmatprep.subr.mxu0 0.0
    %1198 = vmatpush2.msra.mxu0 0.0
    %1199 = vmatprep.subr.mxu0 0.0
    %1200 = vmatpush2.msra.mxu0 0.0
    %1201 = vmatprep.subr.mxu0 0.0
    %1202 = vmatpush2.msra.mxu0 0.0
    %1203 = vmatprep.subr.mxu0 0.0
    %1204 = vmatpush2.msra.mxu0 0.0
    %1205 = vmatprep.subr.mxu0 0.0
    %1206 = vmatpush2.msra.mxu0 0.0
    %1207 = vmatprep.subr.mxu0 0.0
    %1208 = vmatpush2.msra.mxu0 0.0
    %1209 = vmatprep.subr.mxu0 0.0
    %1210 = vmatpush2.msra.mxu0 0.0
    %1211 = vmatprep.subr.mxu0 0.0
    %1212 = vmatpush2.msra.mxu0 0.0
    %1213 = vmatprep.subr.mxu0 0.0
    %1214 = vmatpush2.msra.mxu0 0.0
    %1215 = vmatprep.subr.mxu0 0.0
    %1216 = vmatpush2.msra.mxu0 0.0
    %1217 = vmatprep.subr.mxu0 0.0
    %1218 = vmatpush2.msra.mxu0 0.0
    %1219 = vmatprep.subr.mxu0 0.0
    %1220 = vmatpush2.msra.mxu0 0.0
    %1221 = vmatprep.mubr.f32.mxu0 0.0
    %1222 = vmatmul.mubr.f32.gmra.mxu0 %v1146
    %v1223 = vpop.f32.mrf.mxu0
    %v1224 = vadd.f32 0.0, %v1223
    %v1225 = vpop.f32.mrf.mxu0
    %1226 = vmatprep.mubr.f32.mxu0 0.0
    %1227 = vmatmul.mubr.f32.gmra.mxu0 %v1149
    %v1228 = vpop.f32.mrf.mxu0
    %v1229 = vadd.f32 0.0, %v1228
    %v1230 = vpop.f32.mrf.mxu0
    %1231 = vmatprep.mubr.f32.mxu0 0.0
    %1232 = vmatmul.mubr.f32.gmra.mxu0 %v1152
    %v1233 = vpop.f32.mrf.mxu0
    %v1234 = vadd.f32 0.0, %v1233
    %v1235 = vpop.f32.mrf.mxu0
    %1236 = vmatprep.mubr.f32.mxu0 0.0
    %1237 = vmatmul.mubr.f32.gmra.mxu0 %v1155
    %v1238 = vpop.f32.mrf.mxu0
    %v1239 = vadd.f32 0.0, %v1238
    %v1240 = vpop.f32.mrf.mxu0
    %1241 = vdwg.mxu0
    %1243 = vrot.lane.b32.xlu0 %v1229, 8
    %v1244 = vpop.permute.xlu0 %1243
    %1247 = vrot.lane.b32.xlu0 %v1234, 16
    %v1248 = vpop.permute.xlu0 %1247
    %1251 = vrot.lane.b32.xlu0 %v1239, 24
    %v1252 = vpop.permute.xlu0 %1251
    %v1254 = vsel %vm201, %v1224, %v1244
    %v1255 = vsel %vm477, %v1254, %v1248
    %v1256 = vsel %vm479, %v1255, %v1252
    %v1257 = vlaneseq
    %v1258 = vshrl.u32 %v1257, 7
    %v1259 = vsub.s32 2, %v1258
    %v1260 = vrot.slane %v887, %v1259
    %v1262 = vsel %vm112, %v1256, 0
    %1264 = vmatprep.subr.mxu0 0.0
    %1265 = vmatpush1.msra.mxu0 0.0
    %1266 = vmatprep.subr.mxu0 0.0
    %1267 = vmatpush1.msra.mxu0 0.0
    %1268 = vmatprep.subr.mxu0 0.0
    %1269 = vmatpush1.msra.mxu0 0.0
    %1270 = vmatprep.subr.mxu0 0.0
    %1271 = vmatpush1.msra.mxu0 0.0
    %1272 = vmatprep.subr.mxu0 0.0
    %1273 = vmatpush1.msra.mxu0 0.0
    %1274 = vmatprep.subr.mxu0 0.0
    %1275 = vmatpush1.msra.mxu0 0.0
    %1276 = vmatprep.subr.mxu0 0.0
    %1277 = vmatpush1.msra.mxu0 0.0
    %1278 = vmatprep.subr.mxu0 0.0
    %1279 = vmatpush1.msra.mxu0 0.0
    %1280 = vmatprep.subr.mxu0 0.0
    %1281 = vmatpush1.msra.mxu0 0.0
    %1282 = vmatprep.subr.mxu0 0.0
    %1283 = vmatpush1.msra.mxu0 0.0
    %1284 = vmatprep.subr.mxu0 0.0
    %1285 = vmatpush1.msra.mxu0 0.0
    %1286 = vmatprep.subr.mxu0 0.0
    %1287 = vmatpush1.msra.mxu0 0.0
    %1288 = vmatprep.subr.mxu0 0.0
    %1289 = vmatpush1.msra.mxu0 %v871
    %1290 = vmatprep.subr.mxu0 0.0
    %1291 = vmatpush1.msra.mxu0 %v870
    %1292 = vmatprep.subr.mxu0 0.0
    %1293 = vmatpush1.msra.mxu0 %v869
    %1294 = vmatprep.subr.mxu0 0.0
    %1295 = vmatpush1.msra.mxu0 %v868
    %1296 = vmatprep.subr.mxu0 0.0
    %1297 = vmatpush2.msra.mxu0 0.0
    %1298 = vmatprep.subr.mxu0 0.0
    %1299 = vmatpush2.msra.mxu0 0.0
    %1300 = vmatprep.subr.mxu0 0.0
    %1301 = vmatpush2.msra.mxu0 0.0
    %1302 = vmatprep.subr.mxu0 0.0
    %1303 = vmatpush2.msra.mxu0 0.0
    %1304 = vmatprep.subr.mxu0 0.0
    %1305 = vmatpush2.msra.mxu0 0.0
    %1306 = vmatprep.subr.mxu0 0.0
    %1307 = vmatpush2.msra.mxu0 0.0
    %1308 = vmatprep.subr.mxu0 0.0
    %1309 = vmatpush2.msra.mxu0 0.0
    %1310 = vmatprep.subr.mxu0 0.0
    %1311 = vmatpush2.msra.mxu0 0.0
    %1312 = vmatprep.subr.mxu0 0.0
    %1313 = vmatpush2.msra.mxu0 0.0
    %1314 = vmatprep.subr.mxu0 0.0
    %1315 = vmatpush2.msra.mxu0 0.0
    %1316 = vmatprep.subr.mxu0 0.0
    %1317 = vmatpush2.msra.mxu0 0.0
    %1318 = vmatprep.subr.mxu0 0.0
    %1319 = vmatpush2.msra.mxu0 0.0
    %1320 = vmatprep.subr.mxu0 0.0
    %1321 = vmatpush2.msra.mxu0 0.0
    %1322 = vmatprep.subr.mxu0 0.0
    %1323 = vmatpush2.msra.mxu0 0.0
    %1324 = vmatprep.subr.mxu0 0.0
    %1325 = vmatpush2.msra.mxu0 0.0
    %1326 = vmatprep.subr.mxu0 0.0
    %1327 = vmatpush2.msra.mxu0 0.0
    %1328 = vmatprep.mubr.f32.mxu0 0.0
    %1329 = vmatmul.mubr.f32.gmra.mxu0 %v1262
    %v1330 = vpop.f32.mrf.mxu0
    %v1331 = vadd.f32 %v1260, %v1330
    %v1332 = vpop.f32.mrf.mxu0
    %1333 = vdwg.mxu0
    %v1334 = vadd.f32 %v1331, %v859
    %v1335 = vsel %vm112, %v1334, 0.0
    %1336 = vadd.xlane.f32.xlu0 %v1335
    %v1337 = vpop.xlane.xlu0 %1336
    %v1338 = vmul.f32 %v1337, %v562
    %v1339 = vsub.f32 %v1334, %v1338
    %v1340 = vmul.f32 %v1339, %v1339
    %v1341 = vsel %vm112, %v1340, 0.0
    %1342 = vadd.xlane.f32.xlu0 %v1341
    %v1343 = vpop.xlane.xlu0 %1342
    %v1344 = vmul.f32 %v1343, %v562
    %v1345 = vadd.f32 %v1344, 1e-12
    %v1346 = vrsqrt.pop %v1345
    %v1347 = vmul.f32 %v1339, %v1346
    %v1348 = vlaneseq
    %v1349 = vshrl.u32 %v1348, 7
    %v1350 = vsub.s32 3, %v1349
    %v1351 = vrot.slane %v887, %v1350
    %v1352 = vmul.f32 %v1347, %v1351
    %v1353 = vlaneseq
    %v1354 = vshrl.u32 %v1353, 7
    %v1355 = vsub.s32 4, %v1354
    %v1356 = vrot.slane %v887, %v1355
    %v1357 = vadd.f32 %v1352, %v1356
    %v1358 = vlaneseq
    %v1359 = vshrl.u32 %v1358, 7
    %v1360 = vsub.s32 1, %v1359
    %v1361 = vrot.slane %v887, %v1360
    %v1363 = vsel %vm112, %v1357, 0
    %1365 = vmatprep.subr.mxu0 0.0
    %1366 = vmatpush1.msra.mxu0 0.0
    %1367 = vmatprep.subr.mxu0 0.0
    %1368 = vmatpush1.msra.mxu0 0.0
    %1369 = vmatprep.subr.mxu0 0.0
    %1370 = vmatpush1.msra.mxu0 0.0
    %1371 = vmatprep.subr.mxu0 0.0
    %1372 = vmatpush1.msra.mxu0 0.0
    %1373 = vmatprep.subr.mxu0 0.0
    %1374 = vmatpush1.msra.mxu0 0.0
    %1375 = vmatprep.subr.mxu0 0.0
    %1376 = vmatpush1.msra.mxu0 0.0
    %1377 = vmatprep.subr.mxu0 0.0
    %1378 = vmatpush1.msra.mxu0 0.0
    %1379 = vmatprep.subr.mxu0 0.0
    %1380 = vmatpush1.msra.mxu0 0.0
    %1381 = vmatprep.subr.mxu0 0.0
    %1382 = vmatpush1.msra.mxu0 0.0
    %1383 = vmatprep.subr.mxu0 0.0
    %1384 = vmatpush1.msra.mxu0 0.0
    %1385 = vmatprep.subr.mxu0 0.0
    %1386 = vmatpush1.msra.mxu0 0.0
    %1387 = vmatprep.subr.mxu0 0.0
    %1388 = vmatpush1.msra.mxu0 0.0
    %1389 = vmatprep.subr.mxu0 0.0
    %1390 = vmatpush1.msra.mxu0 %v876
    %1391 = vmatprep.subr.mxu0 0.0
    %1392 = vmatpush1.msra.mxu0 %v875
    %1393 = vmatprep.subr.mxu0 0.0
    %1394 = vmatpush1.msra.mxu0 %v874
    %1395 = vmatprep.subr.mxu0 0.0
    %1396 = vmatpush1.msra.mxu0 %v873
    %1397 = vmatprep.subr.mxu0 0.0
    %1398 = vmatpush2.msra.mxu0 0.0
    %1399 = vmatprep.subr.mxu0 0.0
    %1400 = vmatpush2.msra.mxu0 0.0
    %1401 = vmatprep.subr.mxu0 0.0
    %1402 = vmatpush2.msra.mxu0 0.0
    %1403 = vmatprep.subr.mxu0 0.0
    %1404 = vmatpush2.msra.mxu0 0.0
    %1405 = vmatprep.subr.mxu0 0.0
    %1406 = vmatpush2.msra.mxu0 0.0
    %1407 = vmatprep.subr.mxu0 0.0
    %1408 = vmatpush2.msra.mxu0 0.0
    %1409 = vmatprep.subr.mxu0 0.0
    %1410 = vmatpush2.msra.mxu0 0.0
    %1411 = vmatprep.subr.mxu0 0.0
    %1412 = vmatpush2.msra.mxu0 0.0
    %1413 = vmatprep.subr.mxu0 0.0
    %1414 = vmatpush2.msra.mxu0 0.0
    %1415 = vmatprep.subr.mxu0 0.0
    %1416 = vmatpush2.msra.mxu0 0.0
    %1417 = vmatprep.subr.mxu0 0.0
    %1418 = vmatpush2.msra.mxu0 0.0
    %1419 = vmatprep.subr.mxu0 0.0
    %1420 = vmatpush2.msra.mxu0 0.0
    %1421 = vmatprep.subr.mxu0 0.0
    %1422 = vmatpush2.msra.mxu0 0.0
    %1423 = vmatprep.subr.mxu0 0.0
    %1424 = vmatpush2.msra.mxu0 0.0
    %1425 = vmatprep.subr.mxu0 0.0
    %1426 = vmatpush2.msra.mxu0 0.0
    %1427 = vmatprep.subr.mxu0 0.0
    %1428 = vmatpush2.msra.mxu0 0.0
    %1429 = vmatprep.mubr.f32.mxu0 0.0
    %1430 = vmatmul.mubr.f32.gmra.mxu0 %v1363
    %v1431 = vpop.f32.mrf.mxu0
    %v1432 = vadd.f32 %v1361, %v1431
    %v1433 = vpop.f32.mrf.mxu0
    %1434 = vdwg.mxu0
    %v1435 = vmul.f32 %v1432, 0.5
    %v1436 = vmul.f32 %v1432, 0.70710677
    %vm1437 = vcmp.ge.f32.partialorder %v1436, 0.0
    %v1438 = vsel %vm1437, 1.0, -1.0
    %v1439 = vand.u32 2147483647, %v1436
    %v1440 = vmul.f32 %v1439, 0.3275911
    %v1441 = vadd.f32 %v1440, 1.0
    %v1442 = vrcp.pop %v1441
    %v1443 = vmul.f32 1.0, %v1442
    %v1444 = vmul.f32 %v1443, 1.0614054
    %v1445 = vadd.f32 %v1444, -1.4531521
    %v1446 = vmul.f32 %v1445, %v1443
    %v1447 = vadd.f32 %v1446, 1.4214138
    %v1448 = vmul.f32 %v1447, %v1443
    %v1449 = vadd.f32 %v1448, -0.28449672
    %v1450 = vmul.f32 %v1449, %v1443
    %v1451 = vadd.f32 %v1450, 0.2548296
    %v1452 = vmul.f32 %v1451, %v1443
    %v1453 = vsub.f32 0.0, %v1439
    %v1454 = vmul.f32 %v1453, %v1439
    %v1455 = vmul.f32 %v1454, 1.442695
    %v1456 = vpow.pop %v1455
    %v1457 = vmul.f32 %v1452, %v1456
    %v1458 = vsub.f32 1.0, %v1457
    %v1459 = vmul.f32 %v1438, %v1458
    %v1460 = vadd.f32 %v1459, 1.0
    %v1461 = vmul.f32 %v1435, %v1460
    %v1462 = vlaneseq
    %v1463 = vshrl.u32 %v1462, 7
    %v1464 = vsub.s32 5, %v1463
    %v1465 = vrot.slane %v887, %v1464
    %v1467 = vsel %vm691, %v1461, 0
    %1469 = vmatprep.subr.mxu0 0.0
    %1470 = vmatpush1.msra.mxu0 0.0
    %1471 = vmatprep.subr.mxu0 0.0
    %1472 = vmatpush1.msra.mxu0 0.0
    %1473 = vmatprep.subr.mxu0 0.0
    %1474 = vmatpush1.msra.mxu0 0.0
    %1475 = vmatprep.subr.mxu0 0.0
    %1476 = vmatpush1.msra.mxu0 0.0
    %1477 = vmatprep.subr.mxu0 0.0
    %1478 = vmatpush1.msra.mxu0 0.0
    %1479 = vmatprep.subr.mxu0 0.0
    %1480 = vmatpush1.msra.mxu0 0.0
    %1481 = vmatprep.subr.mxu0 0.0
    %1482 = vmatpush1.msra.mxu0 0.0
    %1483 = vmatprep.subr.mxu0 0.0
    %1484 = vmatpush1.msra.mxu0 0.0
    %1485 = vmatprep.subr.mxu0 0.0
    %1486 = vmatpush1.msra.mxu0 %v885
    %1487 = vmatprep.subr.mxu0 0.0
    %1488 = vmatpush1.msra.mxu0 %v884
    %1489 = vmatprep.subr.mxu0 0.0
    %1490 = vmatpush1.msra.mxu0 %v883
    %1491 = vmatprep.subr.mxu0 0.0
    %1492 = vmatpush1.msra.mxu0 %v882
    %1493 = vmatprep.subr.mxu0 0.0
    %1494 = vmatpush1.msra.mxu0 %v881
    %1495 = vmatprep.subr.mxu0 0.0
    %1496 = vmatpush1.msra.mxu0 %v880
    %1497 = vmatprep.subr.mxu0 0.0
    %1498 = vmatpush1.msra.mxu0 %v879
    %1499 = vmatprep.subr.mxu0 0.0
    %1500 = vmatpush1.msra.mxu0 %v878
    %1501 = vmatprep.subr.mxu0 0.0
    %1502 = vmatpush2.msra.mxu0 0.0
    %1503 = vmatprep.subr.mxu0 0.0
    %1504 = vmatpush2.msra.mxu0 0.0
    %1505 = vmatprep.subr.mxu0 0.0
    %1506 = vmatpush2.msra.mxu0 0.0
    %1507 = vmatprep.subr.mxu0 0.0
    %1508 = vmatpush2.msra.mxu0 0.0
    %1509 = vmatprep.subr.mxu0 0.0
    %1510 = vmatpush2.msra.mxu0 0.0
    %1511 = vmatprep.subr.mxu0 0.0
    %1512 = vmatpush2.msra.mxu0 0.0
    %1513 = vmatprep.subr.mxu0 0.0
    %1514 = vmatpush2.msra.mxu0 0.0
    %1515 = vmatprep.subr.mxu0 0.0
    %1516 = vmatpush2.msra.mxu0 0.0
    %1517 = vmatprep.subr.mxu0 0.0
    %1518 = vmatpush2.msra.mxu0 0.0
    %1519 = vmatprep.subr.mxu0 0.0
    %1520 = vmatpush2.msra.mxu0 0.0
    %1521 = vmatprep.subr.mxu0 0.0
    %1522 = vmatpush2.msra.mxu0 0.0
    %1523 = vmatprep.subr.mxu0 0.0
    %1524 = vmatpush2.msra.mxu0 0.0
    %1525 = vmatprep.subr.mxu0 0.0
    %1526 = vmatpush2.msra.mxu0 0.0
    %1527 = vmatprep.subr.mxu0 0.0
    %1528 = vmatpush2.msra.mxu0 0.0
    %1529 = vmatprep.subr.mxu0 0.0
    %1530 = vmatpush2.msra.mxu0 0.0
    %1531 = vmatprep.subr.mxu0 0.0
    %1532 = vmatpush2.msra.mxu0 0.0
    %1533 = vmatprep.mubr.f32.mxu0 0.0
    %1534 = vmatmul.mubr.f32.gmra.mxu0 %v1467
    %v1535 = vpop.f32.mrf.mxu0
    %v1536 = vadd.f32 %v1465, %v1535
    %v1537 = vpop.f32.mrf.mxu0
    %1538 = vdwg.mxu0
    %v1539 = vadd.f32 %v1536, %v1357
    %v1540 = vsel %vm112, %v1539, 0.0
    %1541 = vadd.xlane.f32.xlu0 %v1540
    %v1542 = vpop.xlane.xlu0 %1541
    %v1543 = vmul.f32 %v1542, %v562
    %v1544 = vsub.f32 %v1539, %v1543
    %v1545 = vmul.f32 %v1544, %v1544
    %v1546 = vsel %vm112, %v1545, 0.0
    %1547 = vadd.xlane.f32.xlu0 %v1546
    %v1548 = vpop.xlane.xlu0 %1547
    %v1549 = vmul.f32 %v1548, %v562
    %v1550 = vadd.f32 %v1549, 1e-12
    %v1551 = vrsqrt.pop %v1550
    %v1552 = vmul.f32 %v1544, %v1551
    %v1553 = vlaneseq
    %v1554 = vshrl.u32 %v1553, 7
    %v1555 = vsub.s32 6, %v1554
    %v1556 = vrot.slane %v887, %v1555
    %v1557 = vmul.f32 %v1552, %v1556
    %v1558 = vlaneseq
    %v1559 = vshrl.u32 %v1558, 7
    %v1560 = vsub.s32 7, %v1559
    %v1561 = vrot.slane %v887, %v1560
    %v1562 = vadd.f32 %v1557, %v1561
    %1563 = vmatprep.subr.mxu0 0.0
    %1564 = vmatpush1.msra.mxu0 0.0
    %1565 = vmatprep.subr.mxu0 0.0
    %1566 = vmatpush1.msra.mxu0 0.0
    %1567 = vmatprep.subr.mxu0 0.0
    %1568 = vmatpush1.msra.mxu0 0.0
    %1569 = vmatprep.subr.mxu0 0.0
    %1570 = vmatpush1.msra.mxu0 0.0
    %1571 = vmatprep.subr.mxu0 0.0
    %1572 = vmatpush1.msra.mxu0 0.0
    %1573 = vmatprep.subr.mxu0 0.0
    %1574 = vmatpush1.msra.mxu0 0.0
    %1575 = vmatprep.subr.mxu0 0.0
    %1576 = vmatpush1.msra.mxu0 0.0
    %1577 = vmatprep.subr.mxu0 0.0
    %1578 = vmatpush1.msra.mxu0 0.0
    %1579 = vmatprep.subr.mxu0 0.0
    %1580 = vmatpush1.msra.mxu0 0.0
    %1581 = vmatprep.subr.mxu0 0.0
    %1582 = vmatpush1.msra.mxu0 0.0
    %1583 = vmatprep.subr.mxu0 0.0
    %1584 = vmatpush1.msra.mxu0 0.0
    %1585 = vmatprep.subr.mxu0 0.0
    %1586 = vmatpush1.msra.mxu0 0.0
    %1587 = vmatprep.subr.mxu0 0.0
    %1588 = vmatpush1.msra.mxu0 0.0
    %1589 = vmatprep.subr.mxu0 0.0
    %1590 = vmatpush1.msra.mxu0 0.0
    %1591 = vmatprep.subr.mxu0 0.0
    %1592 = vmatpush1.msra.mxu0 0.0
    %1593 = vmatprep.subr.mxu0 0.0
    %1594 = vmatpush1.msra.mxu0 %v859
    %1595 = vmatprep.subr.mxu0 0.0
    %1596 = vmatpush2.msra.mxu0 0.0
    %1597 = vmatprep.subr.mxu0 0.0
    %1598 = vmatpush2.msra.mxu0 0.0
    %1599 = vmatprep.subr.mxu0 0.0
    %1600 = vmatpush2.msra.mxu0 0.0
    %1601 = vmatprep.subr.mxu0 0.0
    %1602 = vmatpush2.msra.mxu0 0.0
    %1603 = vmatprep.subr.mxu0 0.0
    %1604 = vmatpush2.msra.mxu0 0.0
    %1605 = vmatprep.subr.mxu0 0.0
    %1606 = vmatpush2.msra.mxu0 0.0
    %1607 = vmatprep.subr.mxu0 0.0
    %1608 = vmatpush2.msra.mxu0 0.0
    %1609 = vmatprep.subr.mxu0 0.0
    %1610 = vmatpush2.msra.mxu0 0.0
    %1611 = vmatprep.subr.mxu0 0.0
    %1612 = vmatpush2.msra.mxu0 0.0
    %1613 = vmatprep.subr.mxu0 0.0
    %1614 = vmatpush2.msra.mxu0 0.0
    %1615 = vmatprep.subr.mxu0 0.0
    %1616 = vmatpush2.msra.mxu0 0.0
    %1617 = vmatprep.subr.mxu0 0.0
    %1618 = vmatpush2.msra.mxu0 0.0
    %1619 = vmatprep.subr.mxu0 0.0
    %1620 = vmatpush2.msra.mxu0 0.0
    %1621 = vmatprep.subr.mxu0 0.0
    %1622 = vmatpush2.msra.mxu0 0.0
    %1623 = vmatprep.subr.mxu0 0.0
    %1624 = vmatpush2.msra.mxu0 0.0
    %1625 = vmatprep.subr.mxu0 0.0
    %1626 = vmatpush2.msra.mxu0 0.0
    %1627 = vmatprep.mubr.f32.mxu0 0.0
    %1628 = vmatmul.mubr.f32.gmra.mxu0 %v790
    %v1629 = vpop.f32.mrf.mxu0
    %v1630 = vadd.f32 %v1562, %v1629
    %v1631 = vpop.f32.mrf.mxu0
    %1632 = vdwg.mxu0
    %1633 = vst.msk [vmem:[#allocation10] sm:$0xff] %vm112, %v1630
    // Predicated region
    $region50: #{tpu_custom_call.1} parent=1 // pred_check
      _
    $region51: #{tpu_custom_call.1} parent=1 // pred_check_branch
      %1635 = sbr.rel (0) target = $region53
    $region52: #{tpu_custom_call.1} parent=1 // pred_region
      %s1637 = ssub.s32 128, 128
      %1638 = vsyncadd [#allocation4], %s1637
      %s1640 = sshll.u32 [#allocation10], 4
      %s1641 = int_to_ptr.vmem [resolvable:$true] %s1640
      %1643 = dma.vmem_to_hbm [thread:$0]  %s1641, 128, %s8, [#allocation4]
    $region53: #{tpu_custom_call.1} parent=1 // pred_fallthru
      _
    // Predicated region
    $region54: #{tpu_custom_call.1} parent=1 // pred_check
      _
    $region55: #{tpu_custom_call.1} parent=1 // pred_check_branch
      %1645 = sbr.rel (0) target = $region57
    $region56: #{tpu_custom_call.1} parent=1 // pred_region
      %1646 = dma.done [#allocation4], 128
    $region57: #{tpu_custom_call.1} parent=1 // pred_fallthru
      _
    %1647 = vsyncpa [#allocation3], 1
    %1648 = vsyncpa [#allocation6], 1
    %1649 = vsyncpa [#allocation9], 1
    %1650 = vsyncpa [#allocation4], 1

</llo_original>
